<compile_context>
chip_gen: v5e
topology: v5e:2x2
jax: 0.10.0
libtpu: 0.0.40
codegen_flags: <defaults>
</compile_context>

<pallas_src>
import jax
import jax.numpy as jnp
from jax import lax
from jax.experimental import pallas as pl
from jax.experimental.pallas import tpu as pltpu

# ----- synthetic "opt" hyper-parameters (small) -----
B = 2
T_ENC = 8
H = 32          # model_size == encoder_embedding_dim == attention/decoder rnn dim
P = 32          # prenet_dim
A = 16          # attention_dim
N_MEL = 8       # n_mel_channels
NFPS = 2        # n_frames_per_step
MEL_STEP = N_MEL * NFPS
T_DEC = 8       # teacher-forcing mel frames (multiple of NFPS)
T_OUT = T_DEC // NFPS
N_FILT = 4      # attention_location_n_filters
KSIZE = 5       # attention_location_kernel_size (odd)
PAD = (KSIZE - 1) // 2
MASK_VALUE = -1e30   # finite masking value: avoids NaN softmax on fully-masked rows

# TODO(synk): factorized (MFW) weights, accent embedding and prenet dropout paths are off
# (factorized=False, use_language_embedding=False, eval-mode dropout == identity).


def _lin(x, w, b=None):
    # x: [m, k], w: [n, k]  ->  [m, n]   (PyTorch nn.Linear convention)
    y = lax.dot_general(x, w, (((1,), (1,)), ((), ())),
                        preferred_element_type=jnp.float32)
    if b is not None:
        y = y + b
    return y


def _lstm_from_gates(gates, c):
    # PyTorch nn.LSTMCell gate order: i, f, g, o
    i = jax.nn.sigmoid(gates[:, 0 * H:1 * H])
    f = jax.nn.sigmoid(gates[:, 1 * H:2 * H])
    g = jnp.tanh(gates[:, 2 * H:3 * H])
    o = jax.nn.sigmoid(gates[:, 3 * H:4 * H])
    c_new = f * c + i * g
    return o * jnp.tanh(c_new), c_new


def tacotron_decoder_kernel(
    # inputs (whole arrays, VMEM resident for the single invocation)
    src_mask_ref, memory_ref, dec_ref,
    pre_w1_ref, pre_w2_ref,
    arnn_w_ref, arnn_b_ref,
    wq_ref, wm_ref, wloc_ref, wv_ref,
    drnn_w_ref, drnn_b_ref,
    head_w_ref, head_b_ref,
    # outputs
    melgate_out_ref, align_out_ref, ctx_out_ref,
):
    # ---------------- loop-invariant loads / precompute (runs once) ----------------
    memory = memory_ref[...]                                  # [B, T_enc, H]
    valid = src_mask_ref[...] > 0.5                           # [B, T_enc]
    pre_w1 = pre_w1_ref[...]
    pre_w2 = pre_w2_ref[...]
    arnn_w = arnn_w_ref[...]
    arnn_b = arnn_b_ref[...]
    wq = wq_ref[...]
    wloc = wloc_ref[...]                                      # [2*T_enc, T_enc*A]
    wv = wv_ref[...]                                          # [1, A]
    drnn_w = drnn_w_ref[...]
    drnn_b = drnn_b_ref[...]
    head_w = head_w_ref[...]
    head_b = head_b_ref[...]

    # processed_memory = memory_layer(memory)   (Linear, bias=False) -- once per call
    pmem = _lin(memory.reshape(B * T_ENC, H), wm_ref[...]).reshape(B, T_ENC, A)

    def step(t, carry):
        h_a, c_a, h_d, c_d, aw, awc, ctx = carry

        # ---- prenet (2 x Linear(bias=False) + ReLU); dropout treated as identity ----
        frame = dec_ref[t]                                    # [B, MEL_STEP]
        pre = jnp.maximum(_lin(frame, pre_w1), 0.0)
        pre = jnp.maximum(_lin(pre, pre_w2), 0.0)             # [B, P]

        # ---- attention RNN: one fused gate matmul  [x | h] @ [w_ih | w_hh]^T ----
        xa = jnp.concatenate([pre, ctx, h_a], axis=-1)        # [B, P + 2H]
        h_a, c_a = _lstm_from_gates(_lin(xa, arnn_w, arnn_b), c_a)

        # ---- location-sensitive attention ----
        pq = _lin(h_a, wq)                                    # processed query [B, A]
        # location conv (2 channels) + location dense folded into ONE banded matmul
        # whose output last dim is T_enc*A == 128 (lane-dense).
        u = jnp.concatenate([aw, awc], axis=-1)               # [B, 2*T_enc]
        ploc = lax.dot_general(u, wloc, (((1,), (0,)), ((), ())),
                               preferred_element_type=jnp.float32)
        ploc = ploc.reshape(B, T_ENC, A)
        energies = jnp.sum(jnp.tanh(pq[:, None, :] + ploc + pmem) * wv[None],
                           axis=-1)                           # [B, T_enc]
        energies = jnp.where(valid, energies, MASK_VALUE)
        m = jnp.max(energies, axis=1, keepdims=True)
        e = jnp.exp(energies - m)
        denom = jnp.sum(e, axis=1, keepdims=True)
        aw = e * pl.reciprocal(denom, approx=True)            # softmax over T_enc
        ctx = jnp.sum(aw[:, :, None] * memory, axis=1)        # [B, H]
        awc = awc + aw

        # ---- decoder RNN (fused gates) ----
        xd = jnp.concatenate([h_a, ctx, h_d], axis=-1)        # [B, 3H]
        h_d, c_d = _lstm_from_gates(_lin(xd, drnn_w, drnn_b), c_d)

        # ---- fused mel + gate projection head ----
        hc = jnp.concatenate([h_d, ctx], axis=-1)             # [B, 2H]
        melgate = _lin(hc, head_w, head_b)                    # [B, MEL_STEP + 1]

        melgate_out_ref[t] = melgate
        align_out_ref[t] = aw
        ctx_out_ref[t] = ctx
        return (h_a, c_a, h_d, c_d, aw, awc, ctx)

    zs = jnp.zeros((B, H), jnp.float32)
    zt = jnp.zeros((B, T_ENC), jnp.float32)
    lax.fori_loop(0, T_OUT, step, (zs, zs, zs, zs, zt, zt, zs), unroll=True)


# ---------------- wrapper-side weight repacking (pure glue, loop-invariant) ----------------
def _prepare_kernel_params(p):
    # fused LSTM gate weights: one matmul per cell
    arnn_w = jnp.concatenate([p["arnn_wih"], p["arnn_whh"]], axis=1)   # [4H, P+2H]
    arnn_b = p["arnn_bih"] + p["arnn_bhh"]
    drnn_w = jnp.concatenate([p["drnn_wih"], p["drnn_whh"]], axis=1)   # [4H, 3H]
    drnn_b = p["drnn_bih"] + p["drnn_bhh"]
    # fused mel + gate output head
    head_w = jnp.concatenate([p["proj_w"], p["gate_w"]], axis=0)       # [MEL_STEP+1, 2H]
    head_b = jnp.concatenate([p["proj_b"], p["gate_b"]], axis=1)       # [1, MEL_STEP+1]
    # Fold location conv (in-channels = [attn_weights, attn_weights_cum]) and the
    # location dense layer into one banded matmul weight:
    #   W_loc[c*T_enc + s, t*A + a] = sum_f wconv[f, c, k] * wlocd[a, f],  k = s - t + PAD
    weff = jnp.einsum("fck,af->cka", p["wconv"], p["wlocd"])           # [2, K, A]
    s = jnp.arange(T_ENC)[:, None]
    t = jnp.arange(T_ENC)[None, :]
    k = s - t + PAD
    in_band = ((k >= 0) & (k < KSIZE))[:, :, None]                     # [T_enc, T_enc, 1]
    kc = jnp.clip(k, 0, KSIZE - 1)
    bands = [jnp.where(in_band, weff[c][kc], 0.0).reshape(T_ENC, T_ENC * A)
             for c in range(2)]
    wloc = jnp.concatenate(bands, axis=0)                              # [2*T_enc, T_enc*A]
    return dict(pre_w1=p["pre_w1"], pre_w2=p["pre_w2"],
                arnn_w=arnn_w, arnn_b=arnn_b, wq=p["wq"], wm=p["wm"],
                wloc=wloc, wv=p["wv"], drnn_w=drnn_w, drnn_b=drnn_b,
                head_w=head_w, head_b=head_b)


def _run_decoder_kernel(src_mask, memory, dec_frames, kp):
    vmem = lambda: pl.BlockSpec(memory_space=pltpu.MemorySpace.VMEM)
    return pl.pallas_call(
        tacotron_decoder_kernel,
        out_shape=(
            jax.ShapeDtypeStruct((T_OUT, B, MEL_STEP + 1), jnp.float32),
            jax.ShapeDtypeStruct((T_OUT, B, T_ENC), jnp.float32),
            jax.ShapeDtypeStruct((T_OUT, B, H), jnp.float32),
        ),
        in_specs=[vmem() for _ in range(15)],
        out_specs=(vmem(), vmem(), vmem()),
    )(src_mask, memory, dec_frames,
      kp["pre_w1"], kp["pre_w2"], kp["arnn_w"], kp["arnn_b"],
      kp["wq"], kp["wm"], kp["wloc"], kp["wv"],
      kp["drnn_w"], kp["drnn_b"], kp["head_w"], kp["head_b"])


def _frames_from_decoder_inputs(decoder_inputs):
    # parse_decoder_inputs + prepend go-frame, keep only the T_OUT frames actually used
    di = jnp.transpose(decoder_inputs, (0, 2, 1))              # [B, T_dec, n_mel]
    di = di.reshape(B, T_OUT, MEL_STEP)                        # [B, T_out, n_mel*nfps]
    di = jnp.transpose(di, (1, 0, 2))                          # [T_out, B, M]
    go = jnp.zeros((1, B, MEL_STEP), jnp.float32)              # get_go_frame
    return jnp.concatenate([go, di], axis=0)[:T_OUT]


@jax.jit
def tacotron_decoder_forward(src_mask, encoder_out, decoder_inputs, params):
    dec_frames = _frames_from_decoder_inputs(decoder_inputs)
    kp = _prepare_kernel_params(params)
    melgate_s, align_s, ctx_s = _run_decoder_kernel(src_mask, encoder_out, dec_frames, kp)
    # parse_decoder_outputs
    mel_s = melgate_s[:, :, :MEL_STEP]
    gate_s = melgate_s[:, :, MEL_STEP:]
    mel = jnp.transpose(mel_s, (1, 0, 2)).reshape(B, T_OUT * NFPS, N_MEL)
    mel = jnp.transpose(mel, (0, 2, 1))                        # [B, n_mel, T_out*nfps]
    gate = jnp.transpose(gate_s[:, :, 0], (1, 0))              # [B, T_out]
    align = jnp.transpose(align_s, (1, 0, 2))                  # [B, T_out, T_enc]
    return mel, gate, align, ctx_s                             # ctx: [T_out, B, H]


# ---------------- deterministic parameter init ----------------
def init_params(key):
    ks = jax.random.split(key, 19)
    n = lambda k, s: (0.1 * jax.random.normal(k, s)).astype(jnp.float32)
    return {
        "pre_w1": n(ks[0], (P, MEL_STEP)),
        "pre_w2": n(ks[1], (P, P)),
        "arnn_wih": n(ks[2], (4 * H, P + H)),
        "arnn_whh": n(ks[3], (4 * H, H)),
        "arnn_bih": n(ks[4], (1, 4 * H)),
        "arnn_bhh": n(ks[5], (1, 4 * H)),
        "wq": n(ks[6], (A, H)),
        "wm": n(ks[7], (A, H)),
        "wconv": n(ks[8], (N_FILT, 2, KSIZE)),
        "wlocd": n(ks[9], (A, N_FILT)),
        "wv": n(ks[10], (1, A)),
        "drnn_wih": n(ks[11], (4 * H, 2 * H)),
        "drnn_whh": n(ks[12], (4 * H, H)),
        "drnn_bih": n(ks[13], (1, 4 * H)),
        "drnn_bhh": n(ks[14], (1, 4 * H)),
        "proj_w": n(ks[15], (MEL_STEP, 2 * H)),
        "proj_b": n(ks[16], (1, MEL_STEP)),
        "gate_w": n(ks[17], (1, 2 * H)),
        "gate_b": n(ks[18], (1, 1)),
    }


# ---------------- pure-JAX reference (mirrors the PyTorch forward) ----------------
def reference_forward(src_mask, memory, decoder_inputs, p):
    dec_frames = _frames_from_decoder_inputs(decoder_inputs)
    h_a = jnp.zeros((B, H)); c_a = jnp.zeros((B, H))
    h_d = jnp.zeros((B, H)); c_d = jnp.zeros((B, H))
    aw = jnp.zeros((B, T_ENC)); awc = jnp.zeros((B, T_ENC))
    ctx = jnp.zeros((B, H))
    pmem = memory @ p["wm"].T

    def lstm(x, h, c, wih, whh, bih, bhh):
        g = x @ wih.T + h @ whh.T + bih + bhh
        i, f, gg, o = jnp.split(g, 4, axis=1)
        c2 = jax.nn.sigmoid(f) * c + jax.nn.sigmoid(i) * jnp.tanh(gg)
        return jax.nn.sigmoid(o) * jnp.tanh(c2), c2

    mels, gates, aligns, ctxs = [], [], [], []
    for t in range(T_OUT):
        pre = jax.nn.relu(dec_frames[t] @ p["pre_w1"].T)
        pre = jax.nn.relu(pre @ p["pre_w2"].T)
        x = jnp.concatenate([pre, ctx], -1)
        h_a, c_a = lstm(x, h_a, c_a, p["arnn_wih"], p["arnn_whh"],
                        p["arnn_bih"], p["arnn_bhh"])
        pq = h_a @ p["wq"].T
        loc_in = jnp.stack([aw, awc], axis=1)
        conv = lax.conv_general_dilated(loc_in, p["wconv"], (1,), [(PAD, PAD)],
                                        dimension_numbers=("NCH", "OIH", "NCH"))
        ploc = jnp.transpose(conv, (0, 2, 1)) @ p["wlocd"].T
        en = jnp.sum(jnp.tanh(pq[:, None, :] + ploc + pmem) * p["wv"][0], axis=-1)
        en = jnp.where(src_mask > 0.5, en, MASK_VALUE)
        m = jnp.max(en, axis=1, keepdims=True)
        e = jnp.exp(en - m)
        a = e / jnp.sum(e, axis=1, keepdims=True)
        ctx = jnp.sum(a[:, :, None] * memory, axis=1)
        aw = a; awc = awc + a
        x2 = jnp.concatenate([h_a, ctx], -1)
        h_d, c_d = lstm(x2, h_d, c_d, p["drnn_wih"], p["drnn_whh"],
                        p["drnn_bih"], p["drnn_bhh"])
        hc = jnp.concatenate([h_d, ctx], -1)
        mels.append(hc @ p["proj_w"].T + p["proj_b"][0])
        gates.append(hc @ p["gate_w"].T + p["gate_b"][0])
        aligns.append(a); ctxs.append(ctx)
    mel_s = jnp.stack(mels); gate_s = jnp.stack(gates)
    align_s = jnp.stack(aligns); ctx_s = jnp.stack(ctxs)
    mel = jnp.transpose(jnp.transpose(mel_s, (1, 0, 2)).reshape(B, T_OUT * NFPS, N_MEL),
                        (0, 2, 1))
    return (mel, jnp.transpose(gate_s[:, :, 0], (1, 0)),
            jnp.transpose(align_s, (1, 0, 2)), ctx_s)


if __name__ == "__main__":
    key = jax.random.PRNGKey(0)
    k1, k2, kp = jax.random.split(key, 3)
    encoder_out = jax.random.normal(k1, (B, T_ENC, H), jnp.float32)
    decoder_inputs = jax.random.normal(k2, (B, N_MEL, T_DEC), jnp.float32)
    lengths = jnp.array([T_ENC, 5], jnp.int32)
    src_mask = (jnp.arange(T_ENC)[None, :] < lengths[:, None]).astype(jnp.float32)
    params = init_params(kp)

    outs = tacotron_decoder_forward(src_mask, encoder_out, decoder_inputs, params)
    jax.block_until_ready(outs)

    refs = reference_forward(src_mask, encoder_out, decoder_inputs, params)
    for o, r in zip(outs, refs):
        assert o.shape == r.shape
        assert jnp.allclose(o, r, rtol=5e-3, atol=5e-3)

    print("KERNEL_OK")
</pallas_src>

<mosaic_0001>
module attributes {stable_mosaic.version = 11 : i64} {
  func.func @tacotron_decoder_kernel(%arg0: memref<2x8xf32, #tpu.memory_space<vmem>>, %arg1: memref<2x8x32xf32, #tpu.memory_space<vmem>>, %arg2: memref<4x2x16xf32, #tpu.memory_space<vmem>>, %arg3: memref<32x16xf32, #tpu.memory_space<vmem>>, %arg4: memref<32x32xf32, #tpu.memory_space<vmem>>, %arg5: memref<128x96xf32, #tpu.memory_space<vmem>>, %arg6: memref<1x128xf32, #tpu.memory_space<vmem>>, %arg7: memref<16x32xf32, #tpu.memory_space<vmem>>, %arg8: memref<16x32xf32, #tpu.memory_space<vmem>>, %arg9: memref<16x128xf32, #tpu.memory_space<vmem>>, %arg10: memref<1x16xf32, #tpu.memory_space<vmem>>, %arg11: memref<128x96xf32, #tpu.memory_space<vmem>>, %arg12: memref<1x128xf32, #tpu.memory_space<vmem>>, %arg13: memref<17x64xf32, #tpu.memory_space<vmem>>, %arg14: memref<1x17xf32, #tpu.memory_space<vmem>>, %arg15: memref<4x2x17xf32, #tpu.memory_space<vmem>>, %arg16: memref<4x2x8xf32, #tpu.memory_space<vmem>>, %arg17: memref<4x2x32xf32, #tpu.memory_space<vmem>>) attributes {dimension_semantics = [], scalar_prefetch = 0 : i64, scratch_operands = 0 : i64, tpu.core_type = #tpu.core_type<tc>} {
    %c0 = arith.constant 0 : index
    %c0_0 = arith.constant 0 : index
    %c0_1 = arith.constant 0 : index
    %0 = vector.load %arg1[%c0, %c0_0, %c0_1] : memref<2x8x32xf32, #tpu.memory_space<vmem>>, vector<2x8x32xf32>
    %c0_2 = arith.constant 0 : index
    %c0_3 = arith.constant 0 : index
    %1 = vector.load %arg0[%c0_2, %c0_3] : memref<2x8xf32, #tpu.memory_space<vmem>>, vector<2x8xf32>
    %cst = arith.constant 5.000000e-01 : f32
    %2 = vector.broadcast %cst : f32 to vector<2x8xf32>
    %3 = arith.cmpf ogt, %1, %2 : vector<2x8xf32>
    %c0_4 = arith.constant 0 : index
    %c0_5 = arith.constant 0 : index
    %4 = vector.load %arg3[%c0_4, %c0_5] : memref<32x16xf32, #tpu.memory_space<vmem>>, vector<32x16xf32>
    %c0_6 = arith.constant 0 : index
    %c0_7 = arith.constant 0 : index
    %5 = vector.load %arg4[%c0_6, %c0_7] : memref<32x32xf32, #tpu.memory_space<vmem>>, vector<32x32xf32>
    %c0_8 = arith.constant 0 : index
    %c0_9 = arith.constant 0 : index
    %6 = vector.load %arg5[%c0_8, %c0_9] : memref<128x96xf32, #tpu.memory_space<vmem>>, vector<128x96xf32>
    %c0_10 = arith.constant 0 : index
    %c0_11 = arith.constant 0 : index
    %7 = vector.load %arg6[%c0_10, %c0_11] : memref<1x128xf32, #tpu.memory_space<vmem>>, vector<1x128xf32>
    %c0_12 = arith.constant 0 : index
    %c0_13 = arith.constant 0 : index
    %8 = vector.load %arg7[%c0_12, %c0_13] : memref<16x32xf32, #tpu.memory_space<vmem>>, vector<16x32xf32>
    %c0_14 = arith.constant 0 : index
    %c0_15 = arith.constant 0 : index
    %9 = vector.load %arg9[%c0_14, %c0_15] : memref<16x128xf32, #tpu.memory_space<vmem>>, vector<16x128xf32>
    %c0_16 = arith.constant 0 : index
    %c0_17 = arith.constant 0 : index
    %10 = vector.load %arg10[%c0_16, %c0_17] : memref<1x16xf32, #tpu.memory_space<vmem>>, vector<1x16xf32>
    %c0_18 = arith.constant 0 : index
    %c0_19 = arith.constant 0 : index
    %11 = vector.load %arg11[%c0_18, %c0_19] : memref<128x96xf32, #tpu.memory_space<vmem>>, vector<128x96xf32>
    %c0_20 = arith.constant 0 : index
    %c0_21 = arith.constant 0 : index
    %12 = vector.load %arg12[%c0_20, %c0_21] : memref<1x128xf32, #tpu.memory_space<vmem>>, vector<1x128xf32>
    %c0_22 = arith.constant 0 : index
    %c0_23 = arith.constant 0 : index
    %13 = vector.load %arg13[%c0_22, %c0_23] : memref<17x64xf32, #tpu.memory_space<vmem>>, vector<17x64xf32>
    %c0_24 = arith.constant 0 : index
    %c0_25 = arith.constant 0 : index
    %14 = vector.load %arg14[%c0_24, %c0_25] : memref<1x17xf32, #tpu.memory_space<vmem>>, vector<1x17xf32>
    %15 = vector.shape_cast %0 : vector<2x8x32xf32> to vector<16x32xf32>
    %c0_26 = arith.constant 0 : index
    %c0_27 = arith.constant 0 : index
    %16 = vector.load %arg8[%c0_26, %c0_27] : memref<16x32xf32, #tpu.memory_space<vmem>>, vector<16x32xf32>
    %cst_28 = arith.constant dense<0.000000e+00> : vector<16x16xf32>
    %17 = tpu.matmul %15, %16, %cst_28 {dimension_numbers = #tpu.dot_dimension_numbers<[1], [1], [0], [0], [0, 0, 1, 0], [], []>} : vector<16x32xf32>, vector<16x32xf32>, vector<16x16xf32> -> vector<16x16xf32>
    %18 = vector.shape_cast %17 : vector<16x16xf32> to vector<2x8x16xf32>
    %cst_29 = arith.constant 0.000000e+00 : f32
    %19 = vector.broadcast %cst_29 : f32 to vector<2x32xf32>
    %cst_30 = arith.constant 0.000000e+00 : f32
    %20 = vector.broadcast %cst_30 : f32 to vector<2x8xf32>
    %c0_i32 = arith.constant 0 : i32
    %21 = arith.index_cast %c0_i32 : i32 to index
    %c0_31 = arith.constant 0 : index
    %c0_32 = arith.constant 0 : index
    %22 = vector.load %arg2[%21, %c0_31, %c0_32] : memref<4x2x16xf32, #tpu.memory_space<vmem>>, vector<1x2x16xf32>
    %23 = vector.shape_cast %22 : vector<1x2x16xf32> to vector<2x16xf32>
    %cst_33 = arith.constant dense<0.000000e+00> : vector<2x32xf32>
    %24 = tpu.matmul %23, %4, %cst_33 {dimension_numbers = #tpu.dot_dimension_numbers<[1], [1], [0], [0], [0, 0, 1, 0], [], []>} : vector<2x16xf32>, vector<32x16xf32>, vector<2x32xf32> -> vector<2x32xf32>
    %cst_34 = arith.constant 0.000000e+00 : f32
    %25 = vector.broadcast %cst_34 : f32 to vector<2x32xf32>
    %26 = arith.maximumf %24, %25 : vector<2x32xf32>
    %cst_35 = arith.constant dense<0.000000e+00> : vector<2x32xf32>
    %27 = tpu.matmul %26, %5, %cst_35 {dimension_numbers = #tpu.dot_dimension_numbers<[1], [1], [0], [0], [0, 0, 1, 0], [], []>} : vector<2x32xf32>, vector<32x32xf32>, vector<2x32xf32> -> vector<2x32xf32>
    %cst_36 = arith.constant 0.000000e+00 : f32
    %28 = vector.broadcast %cst_36 : f32 to vector<2x32xf32>
    %29 = arith.maximumf %27, %28 : vector<2x32xf32>
    %30 = tpu.concatenate %29, %19, %19 in 1 : vector<2x32xf32>, vector<2x32xf32>, vector<2x32xf32> -> vector<2x96xf32>
    %cst_37 = arith.constant dense<0.000000e+00> : vector<2x128xf32>
    %31 = tpu.matmul %30, %6, %cst_37 {dimension_numbers = #tpu.dot_dimension_numbers<[1], [1], [0], [0], [0, 0, 1, 0], [], []>} : vector<2x96xf32>, vector<128x96xf32>, vector<2x128xf32> -> vector<2x128xf32>
    %32 = vector.broadcast %7 : vector<1x128xf32> to vector<2x128xf32>
    %33 = arith.addf %31, %32 : vector<2x128xf32>
    %34 = vector.extract_strided_slice %33 {offsets = [0, 0], sizes = [2, 32], strides = [1, 1]} : vector<2x128xf32> to vector<2x32xf32>
    %35 = arith.negf %34 : vector<2x32xf32>
    %36 = math.exp %35 : vector<2x32xf32>
    %cst_38 = arith.constant 1.000000e+00 : f32
    %37 = vector.broadcast %cst_38 : f32 to vector<2x32xf32>
    %38 = arith.addf %37, %36 : vector<2x32xf32>
    %39 = arith.divf %37, %38 : vector<2x32xf32>
    %40 = vector.extract_strided_slice %33 {offsets = [0, 32], sizes = [2, 32], strides = [1, 1]} : vector<2x128xf32> to vector<2x32xf32>
    %41 = arith.negf %40 : vector<2x32xf32>
    %42 = math.exp %41 : vector<2x32xf32>
    %cst_39 = arith.constant 1.000000e+00 : f32
    %43 = vector.broadcast %cst_39 : f32 to vector<2x32xf32>
    %44 = arith.addf %43, %42 : vector<2x32xf32>
    %45 = arith.divf %43, %44 : vector<2x32xf32>
    %46 = vector.extract_strided_slice %33 {offsets = [0, 64], sizes = [2, 32], strides = [1, 1]} : vector<2x128xf32> to vector<2x32xf32>
    %47 = math.tanh %46 : vector<2x32xf32>
    %48 = vector.extract_strided_slice %33 {offsets = [0, 96], sizes = [2, 32], strides = [1, 1]} : vector<2x128xf32> to vector<2x32xf32>
    %49 = arith.negf %48 : vector<2x32xf32>
    %50 = math.exp %49 : vector<2x32xf32>
    %cst_40 = arith.constant 1.000000e+00 : f32
    %51 = vector.broadcast %cst_40 : f32 to vector<2x32xf32>
    %52 = arith.addf %51, %50 : vector<2x32xf32>
    %53 = arith.divf %51, %52 : vector<2x32xf32>
    %54 = arith.mulf %45, %19 : vector<2x32xf32>
    %55 = arith.mulf %39, %47 : vector<2x32xf32>
    %56 = arith.addf %54, %55 : vector<2x32xf32>
    %57 = math.tanh %56 : vector<2x32xf32>
    %58 = arith.mulf %53, %57 : vector<2x32xf32>
    %cst_41 = arith.constant dense<0.000000e+00> : vector<2x16xf32>
    %59 = tpu.matmul %58, %8, %cst_41 {dimension_numbers = #tpu.dot_dimension_numbers<[1], [1], [0], [0], [0, 0, 1, 0], [], []>} : vector<2x32xf32>, vector<16x32xf32>, vector<2x16xf32> -> vector<2x16xf32>
    %60 = tpu.concatenate %20, %20 in 1 : vector<2x8xf32>, vector<2x8xf32> -> vector<2x16xf32>
    %cst_42 = arith.constant dense<0.000000e+00> : vector<2x128xf32>
    %61 = tpu.matmul %60, %9, %cst_42 {dimension_numbers = #tpu.dot_dimension_numbers<[1], [0], [0], [1], [0, 0, 1, 1], [], []>} : vector<2x16xf32>, vector<16x128xf32>, vector<2x128xf32> -> vector<2x128xf32>
    %62 = vector.shape_cast %61 : vector<2x128xf32> to vector<2x8x16xf32>
    %63 = vector.shape_cast %59 : vector<2x16xf32> to vector<2x1x16xf32>
    %64 = vector.broadcast %63 : vector<2x1x16xf32> to vector<2x8x16xf32>
    %65 = arith.addf %64, %62 : vector<2x8x16xf32>
    %66 = arith.addf %65, %18 : vector<2x8x16xf32>
    %67 = math.tanh %66 : vector<2x8x16xf32>
    %68 = vector.shape_cast %10 : vector<1x16xf32> to vector<1x1x16xf32>
    %69 = vector.broadcast %68 : vector<1x1x16xf32> to vector<2x8x16xf32>
    %70 = arith.mulf %67, %69 : vector<2x8x16xf32>
    %cst_43 = arith.constant dense<0.000000e+00> : vector<2x8xf32>
    %71 = vector.multi_reduction <add>, %70, %cst_43 [2] : vector<2x8x16xf32> to vector<2x8xf32>
    %cst_44 = arith.constant -1.000000e+30 : f32
    %72 = vector.broadcast %cst_44 : f32 to vector<2x8xf32>
    %73 = arith.select %3, %71, %72 : vector<2x8xi1>, vector<2x8xf32>
    %cst_45 = arith.constant dense<0xFF800000> : vector<2xf32>
    %74 = vector.multi_reduction <maximumf>, %73, %cst_45 [1] : vector<2x8xf32> to vector<2xf32>
    %75 = vector.shape_cast %74 : vector<2xf32> to vector<2x1xf32>
    %76 = vector.broadcast %75 : vector<2x1xf32> to vector<2x8xf32>
    %77 = arith.subf %73, %76 : vector<2x8xf32>
    %78 = math.exp %77 : vector<2x8xf32>
    %cst_46 = arith.constant dense<0.000000e+00> : vector<2xf32>
    %79 = vector.multi_reduction <add>, %78, %cst_46 [1] : vector<2x8xf32> to vector<2xf32>
    %80 = vector.shape_cast %79 : vector<2xf32> to vector<2x1xf32>
    %81 = tpu.reciprocal %80 {approx = true} : vector<2x1xf32> -> vector<2x1xf32>
    %82 = vector.broadcast %81 : vector<2x1xf32> to vector<2x8xf32>
    %83 = arith.mulf %78, %82 : vector<2x8xf32>
    %84 = vector.shape_cast %83 : vector<2x8xf32> to vector<2x8x1xf32>
    %85 = vector.broadcast %84 : vector<2x8x1xf32> to vector<2x8x32xf32>
    %86 = arith.mulf %85, %0 : vector<2x8x32xf32>
    %cst_47 = arith.constant dense<0.000000e+00> : vector<2x32xf32>
    %87 = vector.multi_reduction <add>, %86, %cst_47 [1] : vector<2x8x32xf32> to vector<2x32xf32>
    %88 = arith.addf %20, %83 : vector<2x8xf32>
    %89 = tpu.concatenate %58, %87, %19 in 1 : vector<2x32xf32>, vector<2x32xf32>, vector<2x32xf32> -> vector<2x96xf32>
    %cst_48 = arith.constant dense<0.000000e+00> : vector<2x128xf32>
    %90 = tpu.matmul %89, %11, %cst_48 {dimension_numbers = #tpu.dot_dimension_numbers<[1], [1], [0], [0], [0, 0, 1, 0], [], []>} : vector<2x96xf32>, vector<128x96xf32>, vector<2x128xf32> -> vector<2x128xf32>
    %91 = vector.broadcast %12 : vector<1x128xf32> to vector<2x128xf32>
    %92 = arith.addf %90, %91 : vector<2x128xf32>
    %93 = vector.extract_strided_slice %92 {offsets = [0, 0], sizes = [2, 32], strides = [1, 1]} : vector<2x128xf32> to vector<2x32xf32>
    %94 = arith.negf %93 : vector<2x32xf32>
    %95 = math.exp %94 : vector<2x32xf32>
    %cst_49 = arith.constant 1.000000e+00 : f32
    %96 = vector.broadcast %cst_49 : f32 to vector<2x32xf32>
    %97 = arith.addf %96, %95 : vector<2x32xf32>
    %98 = arith.divf %96, %97 : vector<2x32xf32>
    %99 = vector.extract_strided_slice %92 {offsets = [0, 32], sizes = [2, 32], strides = [1, 1]} : vector<2x128xf32> to vector<2x32xf32>
    %100 = arith.negf %99 : vector<2x32xf32>
    %101 = math.exp %100 : vector<2x32xf32>
    %cst_50 = arith.constant 1.000000e+00 : f32
    %102 = vector.broadcast %cst_50 : f32 to vector<2x32xf32>
    %103 = arith.addf %102, %101 : vector<2x32xf32>
    %104 = arith.divf %102, %103 : vector<2x32xf32>
    %105 = vector.extract_strided_slice %92 {offsets = [0, 64], sizes = [2, 32], strides = [1, 1]} : vector<2x128xf32> to vector<2x32xf32>
    %106 = math.tanh %105 : vector<2x32xf32>
    %107 = vector.extract_strided_slice %92 {offsets = [0, 96], sizes = [2, 32], strides = [1, 1]} : vector<2x128xf32> to vector<2x32xf32>
    %108 = arith.negf %107 : vector<2x32xf32>
    %109 = math.exp %108 : vector<2x32xf32>
    %cst_51 = arith.constant 1.000000e+00 : f32
    %110 = vector.broadcast %cst_51 : f32 to vector<2x32xf32>
    %111 = arith.addf %110, %109 : vector<2x32xf32>
    %112 = arith.divf %110, %111 : vector<2x32xf32>
    %113 = arith.mulf %104, %19 : vector<2x32xf32>
    %114 = arith.mulf %98, %106 : vector<2x32xf32>
    %115 = arith.addf %113, %114 : vector<2x32xf32>
    %116 = math.tanh %115 : vector<2x32xf32>
    %117 = arith.mulf %112, %116 : vector<2x32xf32>
    %118 = tpu.concatenate %117, %87 in 1 : vector<2x32xf32>, vector<2x32xf32> -> vector<2x64xf32>
    %cst_52 = arith.constant dense<0.000000e+00> : vector<2x17xf32>
    %119 = tpu.matmul %118, %13, %cst_52 {dimension_numbers = #tpu.dot_dimension_numbers<[1], [1], [0], [0], [0, 0, 1, 0], [], []>} : vector<2x64xf32>, vector<17x64xf32>, vector<2x17xf32> -> vector<2x17xf32>
    %120 = vector.broadcast %14 : vector<1x17xf32> to vector<2x17xf32>
    %121 = arith.addf %119, %120 : vector<2x17xf32>
    %122 = arith.index_cast %c0_i32 : i32 to index
    %c0_53 = arith.constant 0 : index
    %c0_54 = arith.constant 0 : index
    %123 = vector.load %arg15[%122, %c0_53, %c0_54] : memref<4x2x17xf32, #tpu.memory_space<vmem>>, vector<1x2x17xf32>
    %124 = vector.shape_cast %123 : vector<1x2x17xf32> to vector<2x17xf32>
    %125 = vector.shape_cast %121 : vector<2x17xf32> to vector<1x2x17xf32>
    tpu.vector_store %arg15[%122, %c0_53, %c0_54], %125 {strides = array<i32>} : memref<4x2x17xf32, #tpu.memory_space<vmem>>, vector<1x2x17xf32>,
    %126 = arith.index_cast %c0_i32 : i32 to index
    %c0_55 = arith.constant 0 : index
    %c0_56 = arith.constant 0 : index
    %127 = vector.load %arg16[%126, %c0_55, %c0_56] : memref<4x2x8xf32, #tpu.memory_space<vmem>>, vector<1x2x8xf32>
    %128 = vector.shape_cast %127 : vector<1x2x8xf32> to vector<2x8xf32>
    %129 = vector.shape_cast %83 : vector<2x8xf32> to vector<1x2x8xf32>
    tpu.vector_store %arg16[%126, %c0_55, %c0_56], %129 {strides = array<i32>} : memref<4x2x8xf32, #tpu.memory_space<vmem>>, vector<1x2x8xf32>,
    %130 = arith.index_cast %c0_i32 : i32 to index
    %c0_57 = arith.constant 0 : index
    %c0_58 = arith.constant 0 : index
    %131 = vector.load %arg17[%130, %c0_57, %c0_58] : memref<4x2x32xf32, #tpu.memory_space<vmem>>, vector<1x2x32xf32>
    %132 = vector.shape_cast %131 : vector<1x2x32xf32> to vector<2x32xf32>
    %133 = vector.shape_cast %87 : vector<2x32xf32> to vector<1x2x32xf32>
    tpu.vector_store %arg17[%130, %c0_57, %c0_58], %133 {strides = array<i32>} : memref<4x2x32xf32, #tpu.memory_space<vmem>>, vector<1x2x32xf32>,
    %c1_i32 = arith.constant 1 : i32
    %134 = arith.index_cast %c1_i32 : i32 to index
    %c0_59 = arith.constant 0 : index
    %c0_60 = arith.constant 0 : index
    %135 = vector.load %arg2[%134, %c0_59, %c0_60] : memref<4x2x16xf32, #tpu.memory_space<vmem>>, vector<1x2x16xf32>
    %136 = vector.shape_cast %135 : vector<1x2x16xf32> to vector<2x16xf32>
    %cst_61 = arith.constant dense<0.000000e+00> : vector<2x32xf32>
    %137 = tpu.matmul %136, %4, %cst_61 {dimension_numbers = #tpu.dot_dimension_numbers<[1], [1], [0], [0], [0, 0, 1, 0], [], []>} : vector<2x16xf32>, vector<32x16xf32>, vector<2x32xf32> -> vector<2x32xf32>
    %cst_62 = arith.constant 0.000000e+00 : f32
    %138 = vector.broadcast %cst_62 : f32 to vector<2x32xf32>
    %139 = arith.maximumf %137, %138 : vector<2x32xf32>
    %cst_63 = arith.constant dense<0.000000e+00> : vector<2x32xf32>
    %140 = tpu.matmul %139, %5, %cst_63 {dimension_numbers = #tpu.dot_dimension_numbers<[1], [1], [0], [0], [0, 0, 1, 0], [], []>} : vector<2x32xf32>, vector<32x32xf32>, vector<2x32xf32> -> vector<2x32xf32>
    %cst_64 = arith.constant 0.000000e+00 : f32
    %141 = vector.broadcast %cst_64 : f32 to vector<2x32xf32>
    %142 = arith.maximumf %140, %141 : vector<2x32xf32>
    %143 = tpu.concatenate %142, %87, %58 in 1 : vector<2x32xf32>, vector<2x32xf32>, vector<2x32xf32> -> vector<2x96xf32>
    %cst_65 = arith.constant dense<0.000000e+00> : vector<2x128xf32>
    %144 = tpu.matmul %143, %6, %cst_65 {dimension_numbers = #tpu.dot_dimension_numbers<[1], [1], [0], [0], [0, 0, 1, 0], [], []>} : vector<2x96xf32>, vector<128x96xf32>, vector<2x128xf32> -> vector<2x128xf32>
    %145 = vector.broadcast %7 : vector<1x128xf32> to vector<2x128xf32>
    %146 = arith.addf %144, %145 : vector<2x128xf32>
    %147 = vector.extract_strided_slice %146 {offsets = [0, 0], sizes = [2, 32], strides = [1, 1]} : vector<2x128xf32> to vector<2x32xf32>
    %148 = arith.negf %147 : vector<2x32xf32>
    %149 = math.exp %148 : vector<2x32xf32>
    %cst_66 = arith.constant 1.000000e+00 : f32
    %150 = vector.broadcast %cst_66 : f32 to vector<2x32xf32>
    %151 = arith.addf %150, %149 : vector<2x32xf32>
    %152 = arith.divf %150, %151 : vector<2x32xf32>
    %153 = vector.extract_strided_slice %146 {offsets = [0, 32], sizes = [2, 32], strides = [1, 1]} : vector<2x128xf32> to vector<2x32xf32>
    %154 = arith.negf %153 : vector<2x32xf32>
    %155 = math.exp %154 : vector<2x32xf32>
    %cst_67 = arith.constant 1.000000e+00 : f32
    %156 = vector.broadcast %cst_67 : f32 to vector<2x32xf32>
    %157 = arith.addf %156, %155 : vector<2x32xf32>
    %158 = arith.divf %156, %157 : vector<2x32xf32>
    %159 = vector.extract_strided_slice %146 {offsets = [0, 64], sizes = [2, 32], strides = [1, 1]} : vector<2x128xf32> to vector<2x32xf32>
    %160 = math.tanh %159 : vector<2x32xf32>
    %161 = vector.extract_strided_slice %146 {offsets = [0, 96], sizes = [2, 32], strides = [1, 1]} : vector<2x128xf32> to vector<2x32xf32>
    %162 = arith.negf %161 : vector<2x32xf32>
    %163 = math.exp %162 : vector<2x32xf32>
    %cst_68 = arith.constant 1.000000e+00 : f32
    %164 = vector.broadcast %cst_68 : f32 to vector<2x32xf32>
    %165 = arith.addf %164, %163 : vector<2x32xf32>
    %166 = arith.divf %164, %165 : vector<2x32xf32>
    %167 = arith.mulf %158, %56 : vector<2x32xf32>
    %168 = arith.mulf %152, %160 : vector<2x32xf32>
    %169 = arith.addf %167, %168 : vector<2x32xf32>
    %170 = math.tanh %169 : vector<2x32xf32>
    %171 = arith.mulf %166, %170 : vector<2x32xf32>
    %cst_69 = arith.constant dense<0.000000e+00> : vector<2x16xf32>
    %172 = tpu.matmul %171, %8, %cst_69 {dimension_numbers = #tpu.dot_dimension_numbers<[1], [1], [0], [0], [0, 0, 1, 0], [], []>} : vector<2x32xf32>, vector<16x32xf32>, vector<2x16xf32> -> vector<2x16xf32>
    %173 = tpu.concatenate %83, %88 in 1 : vector<2x8xf32>, vector<2x8xf32> -> vector<2x16xf32>
    %cst_70 = arith.constant dense<0.000000e+00> : vector<2x128xf32>
    %174 = tpu.matmul %173, %9, %cst_70 {dimension_numbers = #tpu.dot_dimension_numbers<[1], [0], [0], [1], [0, 0, 1, 1], [], []>} : vector<2x16xf32>, vector<16x128xf32>, vector<2x128xf32> -> vector<2x128xf32>
    %175 = vector.shape_cast %174 : vector<2x128xf32> to vector<2x8x16xf32>
    %176 = vector.shape_cast %172 : vector<2x16xf32> to vector<2x1x16xf32>
    %177 = vector.broadcast %176 : vector<2x1x16xf32> to vector<2x8x16xf32>
    %178 = arith.addf %177, %175 : vector<2x8x16xf32>
    %179 = arith.addf %178, %18 : vector<2x8x16xf32>
    %180 = math.tanh %179 : vector<2x8x16xf32>
    %181 = vector.shape_cast %10 : vector<1x16xf32> to vector<1x1x16xf32>
    %182 = vector.broadcast %181 : vector<1x1x16xf32> to vector<2x8x16xf32>
    %183 = arith.mulf %180, %182 : vector<2x8x16xf32>
    %cst_71 = arith.constant dense<0.000000e+00> : vector<2x8xf32>
    %184 = vector.multi_reduction <add>, %183, %cst_71 [2] : vector<2x8x16xf32> to vector<2x8xf32>
    %cst_72 = arith.constant -1.000000e+30 : f32
    %185 = vector.broadcast %cst_72 : f32 to vector<2x8xf32>
    %186 = arith.select %3, %184, %185 : vector<2x8xi1>, vector<2x8xf32>
    %cst_73 = arith.constant dense<0xFF800000> : vector<2xf32>
    %187 = vector.multi_reduction <maximumf>, %186, %cst_73 [1] : vector<2x8xf32> to vector<2xf32>
    %188 = vector.shape_cast %187 : vector<2xf32> to vector<2x1xf32>
    %189 = vector.broadcast %188 : vector<2x1xf32> to vector<2x8xf32>
    %190 = arith.subf %186, %189 : vector<2x8xf32>
    %191 = math.exp %190 : vector<2x8xf32>
    %cst_74 = arith.constant dense<0.000000e+00> : vector<2xf32>
    %192 = vector.multi_reduction <add>, %191, %cst_74 [1] : vector<2x8xf32> to vector<2xf32>
    %193 = vector.shape_cast %192 : vector<2xf32> to vector<2x1xf32>
    %194 = tpu.reciprocal %193 {approx = true} : vector<2x1xf32> -> vector<2x1xf32>
    %195 = vector.broadcast %194 : vector<2x1xf32> to vector<2x8xf32>
    %196 = arith.mulf %191, %195 : vector<2x8xf32>
    %197 = vector.shape_cast %196 : vector<2x8xf32> to vector<2x8x1xf32>
    %198 = vector.broadcast %197 : vector<2x8x1xf32> to vector<2x8x32xf32>
    %199 = arith.mulf %198, %0 : vector<2x8x32xf32>
    %cst_75 = arith.constant dense<0.000000e+00> : vector<2x32xf32>
    %200 = vector.multi_reduction <add>, %199, %cst_75 [1] : vector<2x8x32xf32> to vector<2x32xf32>
    %201 = arith.addf %88, %196 : vector<2x8xf32>
    %202 = tpu.concatenate %171, %200, %117 in 1 : vector<2x32xf32>, vector<2x32xf32>, vector<2x32xf32> -> vector<2x96xf32>
    %cst_76 = arith.constant dense<0.000000e+00> : vector<2x128xf32>
    %203 = tpu.matmul %202, %11, %cst_76 {dimension_numbers = #tpu.dot_dimension_numbers<[1], [1], [0], [0], [0, 0, 1, 0], [], []>} : vector<2x96xf32>, vector<128x96xf32>, vector<2x128xf32> -> vector<2x128xf32>
    %204 = vector.broadcast %12 : vector<1x128xf32> to vector<2x128xf32>
    %205 = arith.addf %203, %204 : vector<2x128xf32>
    %206 = vector.extract_strided_slice %205 {offsets = [0, 0], sizes = [2, 32], strides = [1, 1]} : vector<2x128xf32> to vector<2x32xf32>
    %207 = arith.negf %206 : vector<2x32xf32>
    %208 = math.exp %207 : vector<2x32xf32>
    %cst_77 = arith.constant 1.000000e+00 : f32
    %209 = vector.broadcast %cst_77 : f32 to vector<2x32xf32>
    %210 = arith.addf %209, %208 : vector<2x32xf32>
    %211 = arith.divf %209, %210 : vector<2x32xf32>
    %212 = vector.extract_strided_slice %205 {offsets = [0, 32], sizes = [2, 32], strides = [1, 1]} : vector<2x128xf32> to vector<2x32xf32>
    %213 = arith.negf %212 : vector<2x32xf32>
    %214 = math.exp %213 : vector<2x32xf32>
    %cst_78 = arith.constant 1.000000e+00 : f32
    %215 = vector.broadcast %cst_78 : f32 to vector<2x32xf32>
    %216 = arith.addf %215, %214 : vector<2x32xf32>
    %217 = arith.divf %215, %216 : vector<2x32xf32>
    %218 = vector.extract_strided_slice %205 {offsets = [0, 64], sizes = [2, 32], strides = [1, 1]} : vector<2x128xf32> to vector<2x32xf32>
    %219 = math.tanh %218 : vector<2x32xf32>
    %220 = vector.extract_strided_slice %205 {offsets = [0, 96], sizes = [2, 32], strides = [1, 1]} : vector<2x128xf32> to vector<2x32xf32>
    %221 = arith.negf %220 : vector<2x32xf32>
    %222 = math.exp %221 : vector<2x32xf32>
    %cst_79 = arith.constant 1.000000e+00 : f32
    %223 = vector.broadcast %cst_79 : f32 to vector<2x32xf32>
    %224 = arith.addf %223, %222 : vector<2x32xf32>
    %225 = arith.divf %223, %224 : vector<2x32xf32>
    %226 = arith.mulf %217, %115 : vector<2x32xf32>
    %227 = arith.mulf %211, %219 : vector<2x32xf32>
    %228 = arith.addf %226, %227 : vector<2x32xf32>
    %229 = math.tanh %228 : vector<2x32xf32>
    %230 = arith.mulf %225, %229 : vector<2x32xf32>
    %231 = tpu.concatenate %230, %200 in 1 : vector<2x32xf32>, vector<2x32xf32> -> vector<2x64xf32>
    %cst_80 = arith.constant dense<0.000000e+00> : vector<2x17xf32>
    %232 = tpu.matmul %231, %13, %cst_80 {dimension_numbers = #tpu.dot_dimension_numbers<[1], [1], [0], [0], [0, 0, 1, 0], [], []>} : vector<2x64xf32>, vector<17x64xf32>, vector<2x17xf32> -> vector<2x17xf32>
    %233 = vector.broadcast %14 : vector<1x17xf32> to vector<2x17xf32>
    %234 = arith.addf %232, %233 : vector<2x17xf32>
    %235 = arith.index_cast %c1_i32 : i32 to index
    %c0_81 = arith.constant 0 : index
    %c0_82 = arith.constant 0 : index
    %236 = vector.load %arg15[%235, %c0_81, %c0_82] : memref<4x2x17xf32, #tpu.memory_space<vmem>>, vector<1x2x17xf32>
    %237 = vector.shape_cast %236 : vector<1x2x17xf32> to vector<2x17xf32>
    %238 = vector.shape_cast %234 : vector<2x17xf32> to vector<1x2x17xf32>
    tpu.vector_store %arg15[%235, %c0_81, %c0_82], %238 {strides = array<i32>} : memref<4x2x17xf32, #tpu.memory_space<vmem>>, vector<1x2x17xf32>,
    %239 = arith.index_cast %c1_i32 : i32 to index
    %c0_83 = arith.constant 0 : index
    %c0_84 = arith.constant 0 : index
    %240 = vector.load %arg16[%239, %c0_83, %c0_84] : memref<4x2x8xf32, #tpu.memory_space<vmem>>, vector<1x2x8xf32>
    %241 = vector.shape_cast %240 : vector<1x2x8xf32> to vector<2x8xf32>
    %242 = vector.shape_cast %196 : vector<2x8xf32> to vector<1x2x8xf32>
    tpu.vector_store %arg16[%239, %c0_83, %c0_84], %242 {strides = array<i32>} : memref<4x2x8xf32, #tpu.memory_space<vmem>>, vector<1x2x8xf32>,
    %243 = arith.index_cast %c1_i32 : i32 to index
    %c0_85 = arith.constant 0 : index
    %c0_86 = arith.constant 0 : index
    %244 = vector.load %arg17[%243, %c0_85, %c0_86] : memref<4x2x32xf32, #tpu.memory_space<vmem>>, vector<1x2x32xf32>
    %245 = vector.shape_cast %244 : vector<1x2x32xf32> to vector<2x32xf32>
    %246 = vector.shape_cast %200 : vector<2x32xf32> to vector<1x2x32xf32>
    tpu.vector_store %arg17[%243, %c0_85, %c0_86], %246 {strides = array<i32>} : memref<4x2x32xf32, #tpu.memory_space<vmem>>, vector<1x2x32xf32>,
    %c2_i32 = arith.constant 2 : i32
    %247 = arith.index_cast %c2_i32 : i32 to index
    %c0_87 = arith.constant 0 : index
    %c0_88 = arith.constant 0 : index
    %248 = vector.load %arg2[%247, %c0_87, %c0_88] : memref<4x2x16xf32, #tpu.memory_space<vmem>>, vector<1x2x16xf32>
    %249 = vector.shape_cast %248 : vector<1x2x16xf32> to vector<2x16xf32>
    %cst_89 = arith.constant dense<0.000000e+00> : vector<2x32xf32>
    %250 = tpu.matmul %249, %4, %cst_89 {dimension_numbers = #tpu.dot_dimension_numbers<[1], [1], [0], [0], [0, 0, 1, 0], [], []>} : vector<2x16xf32>, vector<32x16xf32>, vector<2x32xf32> -> vector<2x32xf32>
    %cst_90 = arith.constant 0.000000e+00 : f32
    %251 = vector.broadcast %cst_90 : f32 to vector<2x32xf32>
    %252 = arith.maximumf %250, %251 : vector<2x32xf32>
    %cst_91 = arith.constant dense<0.000000e+00> : vector<2x32xf32>
    %253 = tpu.matmul %252, %5, %cst_91 {dimension_numbers = #tpu.dot_dimension_numbers<[1], [1], [0], [0], [0, 0, 1, 0], [], []>} : vector<2x32xf32>, vector<32x32xf32>, vector<2x32xf32> -> vector<2x32xf32>
    %cst_92 = arith.constant 0.000000e+00 : f32
    %254 = vector.broadcast %cst_92 : f32 to vector<2x32xf32>
    %255 = arith.maximumf %253, %254 : vector<2x32xf32>
    %256 = tpu.concatenate %255, %200, %171 in 1 : vector<2x32xf32>, vector<2x32xf32>, vector<2x32xf32> -> vector<2x96xf32>
    %cst_93 = arith.constant dense<0.000000e+00> : vector<2x128xf32>
    %257 = tpu.matmul %256, %6, %cst_93 {dimension_numbers = #tpu.dot_dimension_numbers<[1], [1], [0], [0], [0, 0, 1, 0], [], []>} : vector<2x96xf32>, vector<128x96xf32>, vector<2x128xf32> -> vector<2x128xf32>
    %258 = vector.broadcast %7 : vector<1x128xf32> to vector<2x128xf32>
    %259 = arith.addf %257, %258 : vector<2x128xf32>
    %260 = vector.extract_strided_slice %259 {offsets = [0, 0], sizes = [2, 32], strides = [1, 1]} : vector<2x128xf32> to vector<2x32xf32>
    %261 = arith.negf %260 : vector<2x32xf32>
    %262 = math.exp %261 : vector<2x32xf32>
    %cst_94 = arith.constant 1.000000e+00 : f32
    %263 = vector.broadcast %cst_94 : f32 to vector<2x32xf32>
    %264 = arith.addf %263, %262 : vector<2x32xf32>
    %265 = arith.divf %263, %264 : vector<2x32xf32>
    %266 = vector.extract_strided_slice %259 {offsets = [0, 32], sizes = [2, 32], strides = [1, 1]} : vector<2x128xf32> to vector<2x32xf32>
    %267 = arith.negf %266 : vector<2x32xf32>
    %268 = math.exp %267 : vector<2x32xf32>
    %cst_95 = arith.constant 1.000000e+00 : f32
    %269 = vector.broadcast %cst_95 : f32 to vector<2x32xf32>
    %270 = arith.addf %269, %268 : vector<2x32xf32>
    %271 = arith.divf %269, %270 : vector<2x32xf32>
    %272 = vector.extract_strided_slice %259 {offsets = [0, 64], sizes = [2, 32], strides = [1, 1]} : vector<2x128xf32> to vector<2x32xf32>
    %273 = math.tanh %272 : vector<2x32xf32>
    %274 = vector.extract_strided_slice %259 {offsets = [0, 96], sizes = [2, 32], strides = [1, 1]} : vector<2x128xf32> to vector<2x32xf32>
    %275 = arith.negf %274 : vector<2x32xf32>
    %276 = math.exp %275 : vector<2x32xf32>
    %cst_96 = arith.constant 1.000000e+00 : f32
    %277 = vector.broadcast %cst_96 : f32 to vector<2x32xf32>
    %278 = arith.addf %277, %276 : vector<2x32xf32>
    %279 = arith.divf %277, %278 : vector<2x32xf32>
    %280 = arith.mulf %271, %169 : vector<2x32xf32>
    %281 = arith.mulf %265, %273 : vector<2x32xf32>
    %282 = arith.addf %280, %281 : vector<2x32xf32>
    %283 = math.tanh %282 : vector<2x32xf32>
    %284 = arith.mulf %279, %283 : vector<2x32xf32>
    %cst_97 = arith.constant dense<0.000000e+00> : vector<2x16xf32>
    %285 = tpu.matmul %284, %8, %cst_97 {dimension_numbers = #tpu.dot_dimension_numbers<[1], [1], [0], [0], [0, 0, 1, 0], [], []>} : vector<2x32xf32>, vector<16x32xf32>, vector<2x16xf32> -> vector<2x16xf32>
    %286 = tpu.concatenate %196, %201 in 1 : vector<2x8xf32>, vector<2x8xf32> -> vector<2x16xf32>
    %cst_98 = arith.constant dense<0.000000e+00> : vector<2x128xf32>
    %287 = tpu.matmul %286, %9, %cst_98 {dimension_numbers = #tpu.dot_dimension_numbers<[1], [0], [0], [1], [0, 0, 1, 1], [], []>} : vector<2x16xf32>, vector<16x128xf32>, vector<2x128xf32> -> vector<2x128xf32>
    %288 = vector.shape_cast %287 : vector<2x128xf32> to vector<2x8x16xf32>
    %289 = vector.shape_cast %285 : vector<2x16xf32> to vector<2x1x16xf32>
    %290 = vector.broadcast %289 : vector<2x1x16xf32> to vector<2x8x16xf32>
    %291 = arith.addf %290, %288 : vector<2x8x16xf32>
    %292 = arith.addf %291, %18 : vector<2x8x16xf32>
    %293 = math.tanh %292 : vector<2x8x16xf32>
    %294 = vector.shape_cast %10 : vector<1x16xf32> to vector<1x1x16xf32>
    %295 = vector.broadcast %294 : vector<1x1x16xf32> to vector<2x8x16xf32>
    %296 = arith.mulf %293, %295 : vector<2x8x16xf32>
    %cst_99 = arith.constant dense<0.000000e+00> : vector<2x8xf32>
    %297 = vector.multi_reduction <add>, %296, %cst_99 [2] : vector<2x8x16xf32> to vector<2x8xf32>
    %cst_100 = arith.constant -1.000000e+30 : f32
    %298 = vector.broadcast %cst_100 : f32 to vector<2x8xf32>
    %299 = arith.select %3, %297, %298 : vector<2x8xi1>, vector<2x8xf32>
    %cst_101 = arith.constant dense<0xFF800000> : vector<2xf32>
    %300 = vector.multi_reduction <maximumf>, %299, %cst_101 [1] : vector<2x8xf32> to vector<2xf32>
    %301 = vector.shape_cast %300 : vector<2xf32> to vector<2x1xf32>
    %302 = vector.broadcast %301 : vector<2x1xf32> to vector<2x8xf32>
    %303 = arith.subf %299, %302 : vector<2x8xf32>
    %304 = math.exp %303 : vector<2x8xf32>
    %cst_102 = arith.constant dense<0.000000e+00> : vector<2xf32>
    %305 = vector.multi_reduction <add>, %304, %cst_102 [1] : vector<2x8xf32> to vector<2xf32>
    %306 = vector.shape_cast %305 : vector<2xf32> to vector<2x1xf32>
    %307 = tpu.reciprocal %306 {approx = true} : vector<2x1xf32> -> vector<2x1xf32>
    %308 = vector.broadcast %307 : vector<2x1xf32> to vector<2x8xf32>
    %309 = arith.mulf %304, %308 : vector<2x8xf32>
    %310 = vector.shape_cast %309 : vector<2x8xf32> to vector<2x8x1xf32>
    %311 = vector.broadcast %310 : vector<2x8x1xf32> to vector<2x8x32xf32>
    %312 = arith.mulf %311, %0 : vector<2x8x32xf32>
    %cst_103 = arith.constant dense<0.000000e+00> : vector<2x32xf32>
    %313 = vector.multi_reduction <add>, %312, %cst_103 [1] : vector<2x8x32xf32> to vector<2x32xf32>
    %314 = arith.addf %201, %309 : vector<2x8xf32>
    %315 = tpu.concatenate %284, %313, %230 in 1 : vector<2x32xf32>, vector<2x32xf32>, vector<2x32xf32> -> vector<2x96xf32>
    %cst_104 = arith.constant dense<0.000000e+00> : vector<2x128xf32>
    %316 = tpu.matmul %315, %11, %cst_104 {dimension_numbers = #tpu.dot_dimension_numbers<[1], [1], [0], [0], [0, 0, 1, 0], [], []>} : vector<2x96xf32>, vector<128x96xf32>, vector<2x128xf32> -> vector<2x128xf32>
    %317 = vector.broadcast %12 : vector<1x128xf32> to vector<2x128xf32>
    %318 = arith.addf %316, %317 : vector<2x128xf32>
    %319 = vector.extract_strided_slice %318 {offsets = [0, 0], sizes = [2, 32], strides = [1, 1]} : vector<2x128xf32> to vector<2x32xf32>
    %320 = arith.negf %319 : vector<2x32xf32>
    %321 = math.exp %320 : vector<2x32xf32>
    %cst_105 = arith.constant 1.000000e+00 : f32
    %322 = vector.broadcast %cst_105 : f32 to vector<2x32xf32>
    %323 = arith.addf %322, %321 : vector<2x32xf32>
    %324 = arith.divf %322, %323 : vector<2x32xf32>
    %325 = vector.extract_strided_slice %318 {offsets = [0, 32], sizes = [2, 32], strides = [1, 1]} : vector<2x128xf32> to vector<2x32xf32>
    %326 = arith.negf %325 : vector<2x32xf32>
    %327 = math.exp %326 : vector<2x32xf32>
    %cst_106 = arith.constant 1.000000e+00 : f32
    %328 = vector.broadcast %cst_106 : f32 to vector<2x32xf32>
    %329 = arith.addf %328, %327 : vector<2x32xf32>
    %330 = arith.divf %328, %329 : vector<2x32xf32>
    %331 = vector.extract_strided_slice %318 {offsets = [0, 64], sizes = [2, 32], strides = [1, 1]} : vector<2x128xf32> to vector<2x32xf32>
    %332 = math.tanh %331 : vector<2x32xf32>
    %333 = vector.extract_strided_slice %318 {offsets = [0, 96], sizes = [2, 32], strides = [1, 1]} : vector<2x128xf32> to vector<2x32xf32>
    %334 = arith.negf %333 : vector<2x32xf32>
    %335 = math.exp %334 : vector<2x32xf32>
    %cst_107 = arith.constant 1.000000e+00 : f32
    %336 = vector.broadcast %cst_107 : f32 to vector<2x32xf32>
    %337 = arith.addf %336, %335 : vector<2x32xf32>
    %338 = arith.divf %336, %337 : vector<2x32xf32>
    %339 = arith.mulf %330, %228 : vector<2x32xf32>
    %340 = arith.mulf %324, %332 : vector<2x32xf32>
    %341 = arith.addf %339, %340 : vector<2x32xf32>
    %342 = math.tanh %341 : vector<2x32xf32>
    %343 = arith.mulf %338, %342 : vector<2x32xf32>
    %344 = tpu.concatenate %343, %313 in 1 : vector<2x32xf32>, vector<2x32xf32> -> vector<2x64xf32>
    %cst_108 = arith.constant dense<0.000000e+00> : vector<2x17xf32>
    %345 = tpu.matmul %344, %13, %cst_108 {dimension_numbers = #tpu.dot_dimension_numbers<[1], [1], [0], [0], [0, 0, 1, 0], [], []>} : vector<2x64xf32>, vector<17x64xf32>, vector<2x17xf32> -> vector<2x17xf32>
    %346 = vector.broadcast %14 : vector<1x17xf32> to vector<2x17xf32>
    %347 = arith.addf %345, %346 : vector<2x17xf32>
    %348 = arith.index_cast %c2_i32 : i32 to index
    %c0_109 = arith.constant 0 : index
    %c0_110 = arith.constant 0 : index
    %349 = vector.load %arg15[%348, %c0_109, %c0_110] : memref<4x2x17xf32, #tpu.memory_space<vmem>>, vector<1x2x17xf32>
    %350 = vector.shape_cast %349 : vector<1x2x17xf32> to vector<2x17xf32>
    %351 = vector.shape_cast %347 : vector<2x17xf32> to vector<1x2x17xf32>
    tpu.vector_store %arg15[%348, %c0_109, %c0_110], %351 {strides = array<i32>} : memref<4x2x17xf32, #tpu.memory_space<vmem>>, vector<1x2x17xf32>,
    %352 = arith.index_cast %c2_i32 : i32 to index
    %c0_111 = arith.constant 0 : index
    %c0_112 = arith.constant 0 : index
    %353 = vector.load %arg16[%352, %c0_111, %c0_112] : memref<4x2x8xf32, #tpu.memory_space<vmem>>, vector<1x2x8xf32>
    %354 = vector.shape_cast %353 : vector<1x2x8xf32> to vector<2x8xf32>
    %355 = vector.shape_cast %309 : vector<2x8xf32> to vector<1x2x8xf32>
    tpu.vector_store %arg16[%352, %c0_111, %c0_112], %355 {strides = array<i32>} : memref<4x2x8xf32, #tpu.memory_space<vmem>>, vector<1x2x8xf32>,
    %356 = arith.index_cast %c2_i32 : i32 to index
    %c0_113 = arith.constant 0 : index
    %c0_114 = arith.constant 0 : index
    %357 = vector.load %arg17[%356, %c0_113, %c0_114] : memref<4x2x32xf32, #tpu.memory_space<vmem>>, vector<1x2x32xf32>
    %358 = vector.shape_cast %357 : vector<1x2x32xf32> to vector<2x32xf32>
    %359 = vector.shape_cast %313 : vector<2x32xf32> to vector<1x2x32xf32>
    tpu.vector_store %arg17[%356, %c0_113, %c0_114], %359 {strides = array<i32>} : memref<4x2x32xf32, #tpu.memory_space<vmem>>, vector<1x2x32xf32>,
    %c3_i32 = arith.constant 3 : i32
    %360 = arith.index_cast %c3_i32 : i32 to index
    %c0_115 = arith.constant 0 : index
    %c0_116 = arith.constant 0 : index
    %361 = vector.load %arg2[%360, %c0_115, %c0_116] : memref<4x2x16xf32, #tpu.memory_space<vmem>>, vector<1x2x16xf32>
    %362 = vector.shape_cast %361 : vector<1x2x16xf32> to vector<2x16xf32>
    %cst_117 = arith.constant dense<0.000000e+00> : vector<2x32xf32>
    %363 = tpu.matmul %362, %4, %cst_117 {dimension_numbers = #tpu.dot_dimension_numbers<[1], [1], [0], [0], [0, 0, 1, 0], [], []>} : vector<2x16xf32>, vector<32x16xf32>, vector<2x32xf32> -> vector<2x32xf32>
    %cst_118 = arith.constant 0.000000e+00 : f32
    %364 = vector.broadcast %cst_118 : f32 to vector<2x32xf32>
    %365 = arith.maximumf %363, %364 : vector<2x32xf32>
    %cst_119 = arith.constant dense<0.000000e+00> : vector<2x32xf32>
    %366 = tpu.matmul %365, %5, %cst_119 {dimension_numbers = #tpu.dot_dimension_numbers<[1], [1], [0], [0], [0, 0, 1, 0], [], []>} : vector<2x32xf32>, vector<32x32xf32>, vector<2x32xf32> -> vector<2x32xf32>
    %cst_120 = arith.constant 0.000000e+00 : f32
    %367 = vector.broadcast %cst_120 : f32 to vector<2x32xf32>
    %368 = arith.maximumf %366, %367 : vector<2x32xf32>
    %369 = tpu.concatenate %368, %313, %284 in 1 : vector<2x32xf32>, vector<2x32xf32>, vector<2x32xf32> -> vector<2x96xf32>
    %cst_121 = arith.constant dense<0.000000e+00> : vector<2x128xf32>
    %370 = tpu.matmul %369, %6, %cst_121 {dimension_numbers = #tpu.dot_dimension_numbers<[1], [1], [0], [0], [0, 0, 1, 0], [], []>} : vector<2x96xf32>, vector<128x96xf32>, vector<2x128xf32> -> vector<2x128xf32>
    %371 = vector.broadcast %7 : vector<1x128xf32> to vector<2x128xf32>
    %372 = arith.addf %370, %371 : vector<2x128xf32>
    %373 = vector.extract_strided_slice %372 {offsets = [0, 0], sizes = [2, 32], strides = [1, 1]} : vector<2x128xf32> to vector<2x32xf32>
    %374 = arith.negf %373 : vector<2x32xf32>
    %375 = math.exp %374 : vector<2x32xf32>
    %cst_122 = arith.constant 1.000000e+00 : f32
    %376 = vector.broadcast %cst_122 : f32 to vector<2x32xf32>
    %377 = arith.addf %376, %375 : vector<2x32xf32>
    %378 = arith.divf %376, %377 : vector<2x32xf32>
    %379 = vector.extract_strided_slice %372 {offsets = [0, 32], sizes = [2, 32], strides = [1, 1]} : vector<2x128xf32> to vector<2x32xf32>
    %380 = arith.negf %379 : vector<2x32xf32>
    %381 = math.exp %380 : vector<2x32xf32>
    %cst_123 = arith.constant 1.000000e+00 : f32
    %382 = vector.broadcast %cst_123 : f32 to vector<2x32xf32>
    %383 = arith.addf %382, %381 : vector<2x32xf32>
    %384 = arith.divf %382, %383 : vector<2x32xf32>
    %385 = vector.extract_strided_slice %372 {offsets = [0, 64], sizes = [2, 32], strides = [1, 1]} : vector<2x128xf32> to vector<2x32xf32>
    %386 = math.tanh %385 : vector<2x32xf32>
    %387 = vector.extract_strided_slice %372 {offsets = [0, 96], sizes = [2, 32], strides = [1, 1]} : vector<2x128xf32> to vector<2x32xf32>
    %388 = arith.negf %387 : vector<2x32xf32>
    %389 = math.exp %388 : vector<2x32xf32>
    %cst_124 = arith.constant 1.000000e+00 : f32
    %390 = vector.broadcast %cst_124 : f32 to vector<2x32xf32>
    %391 = arith.addf %390, %389 : vector<2x32xf32>
    %392 = arith.divf %390, %391 : vector<2x32xf32>
    %393 = arith.mulf %384, %282 : vector<2x32xf32>
    %394 = arith.mulf %378, %386 : vector<2x32xf32>
    %395 = arith.addf %393, %394 : vector<2x32xf32>
    %396 = math.tanh %395 : vector<2x32xf32>
    %397 = arith.mulf %392, %396 : vector<2x32xf32>
    %cst_125 = arith.constant dense<0.000000e+00> : vector<2x16xf32>
    %398 = tpu.matmul %397, %8, %cst_125 {dimension_numbers = #tpu.dot_dimension_numbers<[1], [1], [0], [0], [0, 0, 1, 0], [], []>} : vector<2x32xf32>, vector<16x32xf32>, vector<2x16xf32> -> vector<2x16xf32>
    %399 = tpu.concatenate %309, %314 in 1 : vector<2x8xf32>, vector<2x8xf32> -> vector<2x16xf32>
    %cst_126 = arith.constant dense<0.000000e+00> : vector<2x128xf32>
    %400 = tpu.matmul %399, %9, %cst_126 {dimension_numbers = #tpu.dot_dimension_numbers<[1], [0], [0], [1], [0, 0, 1, 1], [], []>} : vector<2x16xf32>, vector<16x128xf32>, vector<2x128xf32> -> vector<2x128xf32>
    %401 = vector.shape_cast %400 : vector<2x128xf32> to vector<2x8x16xf32>
    %402 = vector.shape_cast %398 : vector<2x16xf32> to vector<2x1x16xf32>
    %403 = vector.broadcast %402 : vector<2x1x16xf32> to vector<2x8x16xf32>
    %404 = arith.addf %403, %401 : vector<2x8x16xf32>
    %405 = arith.addf %404, %18 : vector<2x8x16xf32>
    %406 = math.tanh %405 : vector<2x8x16xf32>
    %407 = vector.shape_cast %10 : vector<1x16xf32> to vector<1x1x16xf32>
    %408 = vector.broadcast %407 : vector<1x1x16xf32> to vector<2x8x16xf32>
    %409 = arith.mulf %406, %408 : vector<2x8x16xf32>
    %cst_127 = arith.constant dense<0.000000e+00> : vector<2x8xf32>
    %410 = vector.multi_reduction <add>, %409, %cst_127 [2] : vector<2x8x16xf32> to vector<2x8xf32>
    %cst_128 = arith.constant -1.000000e+30 : f32
    %411 = vector.broadcast %cst_128 : f32 to vector<2x8xf32>
    %412 = arith.select %3, %410, %411 : vector<2x8xi1>, vector<2x8xf32>
    %cst_129 = arith.constant dense<0xFF800000> : vector<2xf32>
    %413 = vector.multi_reduction <maximumf>, %412, %cst_129 [1] : vector<2x8xf32> to vector<2xf32>
    %414 = vector.shape_cast %413 : vector<2xf32> to vector<2x1xf32>
    %415 = vector.broadcast %414 : vector<2x1xf32> to vector<2x8xf32>
    %416 = arith.subf %412, %415 : vector<2x8xf32>
    %417 = math.exp %416 : vector<2x8xf32>
    %cst_130 = arith.constant dense<0.000000e+00> : vector<2xf32>
    %418 = vector.multi_reduction <add>, %417, %cst_130 [1] : vector<2x8xf32> to vector<2xf32>
    %419 = vector.shape_cast %418 : vector<2xf32> to vector<2x1xf32>
    %420 = tpu.reciprocal %419 {approx = true} : vector<2x1xf32> -> vector<2x1xf32>
    %421 = vector.broadcast %420 : vector<2x1xf32> to vector<2x8xf32>
    %422 = arith.mulf %417, %421 : vector<2x8xf32>
    %423 = vector.shape_cast %422 : vector<2x8xf32> to vector<2x8x1xf32>
    %424 = vector.broadcast %423 : vector<2x8x1xf32> to vector<2x8x32xf32>
    %425 = arith.mulf %424, %0 : vector<2x8x32xf32>
    %cst_131 = arith.constant dense<0.000000e+00> : vector<2x32xf32>
    %426 = vector.multi_reduction <add>, %425, %cst_131 [1] : vector<2x8x32xf32> to vector<2x32xf32>
    %427 = arith.addf %314, %422 : vector<2x8xf32>
    %428 = tpu.concatenate %397, %426, %343 in 1 : vector<2x32xf32>, vector<2x32xf32>, vector<2x32xf32> -> vector<2x96xf32>
    %cst_132 = arith.constant dense<0.000000e+00> : vector<2x128xf32>
    %429 = tpu.matmul %428, %11, %cst_132 {dimension_numbers = #tpu.dot_dimension_numbers<[1], [1], [0], [0], [0, 0, 1, 0], [], []>} : vector<2x96xf32>, vector<128x96xf32>, vector<2x128xf32> -> vector<2x128xf32>
    %430 = vector.broadcast %12 : vector<1x128xf32> to vector<2x128xf32>
    %431 = arith.addf %429, %430 : vector<2x128xf32>
    %432 = vector.extract_strided_slice %431 {offsets = [0, 0], sizes = [2, 32], strides = [1, 1]} : vector<2x128xf32> to vector<2x32xf32>
    %433 = arith.negf %432 : vector<2x32xf32>
    %434 = math.exp %433 : vector<2x32xf32>
    %cst_133 = arith.constant 1.000000e+00 : f32
    %435 = vector.broadcast %cst_133 : f32 to vector<2x32xf32>
    %436 = arith.addf %435, %434 : vector<2x32xf32>
    %437 = arith.divf %435, %436 : vector<2x32xf32>
    %438 = vector.extract_strided_slice %431 {offsets = [0, 32], sizes = [2, 32], strides = [1, 1]} : vector<2x128xf32> to vector<2x32xf32>
    %439 = arith.negf %438 : vector<2x32xf32>
    %440 = math.exp %439 : vector<2x32xf32>
    %cst_134 = arith.constant 1.000000e+00 : f32
    %441 = vector.broadcast %cst_134 : f32 to vector<2x32xf32>
    %442 = arith.addf %441, %440 : vector<2x32xf32>
    %443 = arith.divf %441, %442 : vector<2x32xf32>
    %444 = vector.extract_strided_slice %431 {offsets = [0, 64], sizes = [2, 32], strides = [1, 1]} : vector<2x128xf32> to vector<2x32xf32>
    %445 = math.tanh %444 : vector<2x32xf32>
    %446 = vector.extract_strided_slice %431 {offsets = [0, 96], sizes = [2, 32], strides = [1, 1]} : vector<2x128xf32> to vector<2x32xf32>
    %447 = arith.negf %446 : vector<2x32xf32>
    %448 = math.exp %447 : vector<2x32xf32>
    %cst_135 = arith.constant 1.000000e+00 : f32
    %449 = vector.broadcast %cst_135 : f32 to vector<2x32xf32>
    %450 = arith.addf %449, %448 : vector<2x32xf32>
    %451 = arith.divf %449, %450 : vector<2x32xf32>
    %452 = arith.mulf %443, %341 : vector<2x32xf32>
    %453 = arith.mulf %437, %445 : vector<2x32xf32>
    %454 = arith.addf %452, %453 : vector<2x32xf32>
    %455 = math.tanh %454 : vector<2x32xf32>
    %456 = arith.mulf %451, %455 : vector<2x32xf32>
    %457 = tpu.concatenate %456, %426 in 1 : vector<2x32xf32>, vector<2x32xf32> -> vector<2x64xf32>
    %cst_136 = arith.constant dense<0.000000e+00> : vector<2x17xf32>
    %458 = tpu.matmul %457, %13, %cst_136 {dimension_numbers = #tpu.dot_dimension_numbers<[1], [1], [0], [0], [0, 0, 1, 0], [], []>} : vector<2x64xf32>, vector<17x64xf32>, vector<2x17xf32> -> vector<2x17xf32>
    %459 = vector.broadcast %14 : vector<1x17xf32> to vector<2x17xf32>
    %460 = arith.addf %458, %459 : vector<2x17xf32>
    %461 = arith.index_cast %c3_i32 : i32 to index
    %c0_137 = arith.constant 0 : index
    %c0_138 = arith.constant 0 : index
    %462 = vector.load %arg15[%461, %c0_137, %c0_138] : memref<4x2x17xf32, #tpu.memory_space<vmem>>, vector<1x2x17xf32>
    %463 = vector.shape_cast %462 : vector<1x2x17xf32> to vector<2x17xf32>
    %464 = vector.shape_cast %460 : vector<2x17xf32> to vector<1x2x17xf32>
    tpu.vector_store %arg15[%461, %c0_137, %c0_138], %464 {strides = array<i32>} : memref<4x2x17xf32, #tpu.memory_space<vmem>>, vector<1x2x17xf32>,
    %465 = arith.index_cast %c3_i32 : i32 to index
    %c0_139 = arith.constant 0 : index
    %c0_140 = arith.constant 0 : index
    %466 = vector.load %arg16[%465, %c0_139, %c0_140] : memref<4x2x8xf32, #tpu.memory_space<vmem>>, vector<1x2x8xf32>
    %467 = vector.shape_cast %466 : vector<1x2x8xf32> to vector<2x8xf32>
    %468 = vector.shape_cast %422 : vector<2x8xf32> to vector<1x2x8xf32>
    tpu.vector_store %arg16[%465, %c0_139, %c0_140], %468 {strides = array<i32>} : memref<4x2x8xf32, #tpu.memory_space<vmem>>, vector<1x2x8xf32>,
    %469 = arith.index_cast %c3_i32 : i32 to index
    %c0_141 = arith.constant 0 : index
    %c0_142 = arith.constant 0 : index
    %470 = vector.load %arg17[%469, %c0_141, %c0_142] : memref<4x2x32xf32, #tpu.memory_space<vmem>>, vector<1x2x32xf32>
    %471 = vector.shape_cast %470 : vector<1x2x32xf32> to vector<2x32xf32>
    %472 = vector.shape_cast %426 : vector<2x32xf32> to vector<1x2x32xf32>
    tpu.vector_store %arg17[%469, %c0_141, %c0_142], %472 {strides = array<i32>} : memref<4x2x32xf32, #tpu.memory_space<vmem>>, vector<1x2x32xf32>,
    %c4_i32 = arith.constant 4 : i32
    return
  }
}

</mosaic_0001>

<llo_original>
// kernel: tacotron_decoder_forward.1
$region0: #{tacotron_decoder_forward.1}
  #allocation0 [shape = 'u32[]', space=smem, size = 0x4, offset = 0x4, fixed_abs, tag = 'smem constant byte address 0x4 - core index']
  #allocation1 [shape = 'u32[72,128]{1,0:T(1,128)}', space=vmem, size = 0x9000, scoped, tag = 'internal scratch']
  %s0 = inlined_call_operand.vmem [shape: f32[2,8], index: 0, kind: input, shape index: {}]
  %s1 = inlined_call_operand.vmem [shape: f32[2,8,32], index: 1, kind: input, shape index: {}]
  %s2 = inlined_call_operand.vmem [shape: f32[4,2,16], index: 2, kind: input, shape index: {}]
  %s3 = inlined_call_operand.vmem [shape: f32[32,16], index: 3, kind: input, shape index: {}]
  %s4 = inlined_call_operand.vmem [shape: f32[32,32], index: 4, kind: input, shape index: {}]
  %s5 = inlined_call_operand.vmem [shape: f32[128,96], index: 5, kind: input, shape index: {}]
  %s6 = inlined_call_operand.vmem [shape: f32[1,128], index: 6, kind: input, shape index: {}]
  %s7 = inlined_call_operand.vmem [shape: f32[16,32], index: 7, kind: input, shape index: {}]
  %s8 = inlined_call_operand.vmem [shape: f32[16,32], index: 8, kind: input, shape index: {}]
  %s9 = inlined_call_operand.vmem [shape: f32[16,128], index: 9, kind: input, shape index: {}]
  %s10 = inlined_call_operand.vmem [shape: f32[1,16], index: 10, kind: input, shape index: {}]
  %s11 = inlined_call_operand.vmem [shape: f32[128,96], index: 11, kind: input, shape index: {}]
  %s12 = inlined_call_operand.vmem [shape: f32[1,128], index: 12, kind: input, shape index: {}]
  %s13 = inlined_call_operand.vmem [shape: f32[17,64], index: 13, kind: input, shape index: {}]
  %s14 = inlined_call_operand.vmem [shape: f32[1,17], index: 14, kind: input, shape index: {}]
  %s15 = inlined_call_operand.vmem [shape: f32[4,2,17], index: 15, kind: output, shape index: {0}]
  %s16 = inlined_call_operand.vmem [shape: f32[4,2,8], index: 16, kind: output, shape index: {1}]
  %s17 = inlined_call_operand.hbm [shape: f32[4,2,32], index: 17, kind: output, shape index: {2}]
  %18 = xla_tuple %s15, %s16, %s17
  %s19 = sld [smem:[#allocation0]]
  $region86: #{tacotron_decoder_forward.1} parent=0
    _
  %s21 = ssub.s32 1, %s19
  %s22 = scalar_select 0, %s21, %s19
  $region1: #{tacotron_decoder_forward.1} parent=0
    #allocation2 [shape = 'u8[4096]{0}', space=vmem, size = 0x1000, scoped, tag = 'output window, operand 2, single buffered']
    #allocation3 [shape = 's32[1]{0}', space=sflag, size = 0x4, scoped, tag = 'scoped memory for tacotron_decoder_forward.1']
    %23 = vsyncpa [#allocation3], 0
    // Predicated region
    $region2: #{tacotron_decoder_forward.1} parent=1 // pred_check
      _
    $region3: #{tacotron_decoder_forward.1} parent=1 // pred_check_branch
      %25 = sbr.rel (0) target = $region5
    $region4: #{tacotron_decoder_forward.1} parent=1 // pred_region
      _
    $region5: #{tacotron_decoder_forward.1} parent=1 // pred_fallthru
      _
    // Predicated region
    $region6: #{tacotron_decoder_forward.1} parent=1 // pred_check
      _
    $region7: #{tacotron_decoder_forward.1} parent=1 // pred_check_branch
      %27 = sbr.rel (0) target = $region9
    $region8: #{tacotron_decoder_forward.1} parent=1 // pred_region
      _
    $region9: #{tacotron_decoder_forward.1} parent=1 // pred_fallthru
      _
    // Predicated region
    $region10: #{tacotron_decoder_forward.1} parent=1 // pred_check
      _
    $region11: #{tacotron_decoder_forward.1} parent=1 // pred_check_branch
      %29 = sbr.rel (0) target = $region13
    $region12: #{tacotron_decoder_forward.1} parent=1 // pred_region
      _
    $region13: #{tacotron_decoder_forward.1} parent=1 // pred_fallthru
      _
    // Predicated region
    $region14: #{tacotron_decoder_forward.1} parent=1 // pred_check
      _
    $region15: #{tacotron_decoder_forward.1} parent=1 // pred_check_branch
      %31 = sbr.rel (0) target = $region17
    $region16: #{tacotron_decoder_forward.1} parent=1 // pred_region
      _
    $region17: #{tacotron_decoder_forward.1} parent=1 // pred_fallthru
      _
    // Predicated region
    $region18: #{tacotron_decoder_forward.1} parent=1 // pred_check
      _
    $region19: #{tacotron_decoder_forward.1} parent=1 // pred_check_branch
      %33 = sbr.rel (0) target = $region21
    $region20: #{tacotron_decoder_forward.1} parent=1 // pred_region
      _
    $region21: #{tacotron_decoder_forward.1} parent=1 // pred_fallthru
      _
    // Predicated region
    $region22: #{tacotron_decoder_forward.1} parent=1 // pred_check
      _
    $region23: #{tacotron_decoder_forward.1} parent=1 // pred_check_branch
      %35 = sbr.rel (0) target = $region25
    $region24: #{tacotron_decoder_forward.1} parent=1 // pred_region
      _
    $region25: #{tacotron_decoder_forward.1} parent=1 // pred_fallthru
      _
    // Predicated region
    $region26: #{tacotron_decoder_forward.1} parent=1 // pred_check
      _
    $region27: #{tacotron_decoder_forward.1} parent=1 // pred_check_branch
      %37 = sbr.rel (0) target = $region29
    $region28: #{tacotron_decoder_forward.1} parent=1 // pred_region
      _
    $region29: #{tacotron_decoder_forward.1} parent=1 // pred_fallthru
      _
    // Predicated region
    $region30: #{tacotron_decoder_forward.1} parent=1 // pred_check
      _
    $region31: #{tacotron_decoder_forward.1} parent=1 // pred_check_branch
      %39 = sbr.rel (0) target = $region33
    $region32: #{tacotron_decoder_forward.1} parent=1 // pred_region
      _
    $region33: #{tacotron_decoder_forward.1} parent=1 // pred_fallthru
      _
    // Predicated region
    $region34: #{tacotron_decoder_forward.1} parent=1 // pred_check
      _
    $region35: #{tacotron_decoder_forward.1} parent=1 // pred_check_branch
      %41 = sbr.rel (0) target = $region37
    $region36: #{tacotron_decoder_forward.1} parent=1 // pred_region
      _
    $region37: #{tacotron_decoder_forward.1} parent=1 // pred_fallthru
      _
    // Predicated region
    $region38: #{tacotron_decoder_forward.1} parent=1 // pred_check
      _
    $region39: #{tacotron_decoder_forward.1} parent=1 // pred_check_branch
      %43 = sbr.rel (0) target = $region41
    $region40: #{tacotron_decoder_forward.1} parent=1 // pred_region
      _
    $region41: #{tacotron_decoder_forward.1} parent=1 // pred_fallthru
      _
    // Predicated region
    $region42: #{tacotron_decoder_forward.1} parent=1 // pred_check
      _
    $region43: #{tacotron_decoder_forward.1} parent=1 // pred_check_branch
      %45 = sbr.rel (0) target = $region45
    $region44: #{tacotron_decoder_forward.1} parent=1 // pred_region
      _
    $region45: #{tacotron_decoder_forward.1} parent=1 // pred_fallthru
      _
    // Predicated region
    $region46: #{tacotron_decoder_forward.1} parent=1 // pred_check
      _
    $region47: #{tacotron_decoder_forward.1} parent=1 // pred_check_branch
      %47 = sbr.rel (0) target = $region49
    $region48: #{tacotron_decoder_forward.1} parent=1 // pred_region
      _
    $region49: #{tacotron_decoder_forward.1} parent=1 // pred_fallthru
      _
    // Predicated region
    $region50: #{tacotron_decoder_forward.1} parent=1 // pred_check
      _
    $region51: #{tacotron_decoder_forward.1} parent=1 // pred_check_branch
      %49 = sbr.rel (0) target = $region53
    $region52: #{tacotron_decoder_forward.1} parent=1 // pred_region
      _
    $region53: #{tacotron_decoder_forward.1} parent=1 // pred_fallthru
      _
    // Predicated region
    $region54: #{tacotron_decoder_forward.1} parent=1 // pred_check
      _
    $region55: #{tacotron_decoder_forward.1} parent=1 // pred_check_branch
      %51 = sbr.rel (0) target = $region57
    $region56: #{tacotron_decoder_forward.1} parent=1 // pred_region
      _
    $region57: #{tacotron_decoder_forward.1} parent=1 // pred_fallthru
      _
    // Predicated region
    $region58: #{tacotron_decoder_forward.1} parent=1 // pred_check
      _
    $region59: #{tacotron_decoder_forward.1} parent=1 // pred_check_branch
      %53 = sbr.rel (0) target = $region61
    $region60: #{tacotron_decoder_forward.1} parent=1 // pred_region
      _
    $region61: #{tacotron_decoder_forward.1} parent=1 // pred_fallthru
      _
    %v54 = vld [vmem:[%s1] sm:$0xff]
    %v55 = vld [vmem:[%s1 + $0x8] sm:$0xff]
    %v56 = vld [vmem:[%s0] sm:$0x3]
    %vm57 = vcmp.gt.f32.partialorder %v56, 0.5
    %v58 = vld [vmem:[%s3] sm:$0xff]
    %v59 = vld [vmem:[%s3 + $0x8] sm:$0xff]
    %v60 = vld [vmem:[%s3 + $0x10] sm:$0xff]
    %v61 = vld [vmem:[%s3 + $0x18] sm:$0xff]
    %v62 = vld [vmem:[%s4] sm:$0xff]
    %v63 = vld [vmem:[%s4 + $0x8] sm:$0xff]
    %v64 = vld [vmem:[%s4 + $0x10] sm:$0xff]
    %v65 = vld [vmem:[%s4 + $0x18] sm:$0xff]
    %v66 = vld [vmem:[%s5] sm:$0xff]
    %v67 = vld [vmem:[%s5 + $0x8] sm:$0xff]
    %v68 = vld [vmem:[%s5 + $0x10] sm:$0xff]
    %v69 = vld [vmem:[%s5 + $0x18] sm:$0xff]
    %v70 = vld [vmem:[%s5 + $0x20] sm:$0xff]
    %v71 = vld [vmem:[%s5 + $0x28] sm:$0xff]
    %v72 = vld [vmem:[%s5 + $0x30] sm:$0xff]
    %v73 = vld [vmem:[%s5 + $0x38] sm:$0xff]
    %v74 = vld [vmem:[%s5 + $0x40] sm:$0xff]
    %v75 = vld [vmem:[%s5 + $0x48] sm:$0xff]
    %v76 = vld [vmem:[%s5 + $0x50] sm:$0xff]
    %v77 = vld [vmem:[%s5 + $0x58] sm:$0xff]
    %v78 = vld [vmem:[%s5 + $0x60] sm:$0xff]
    %v79 = vld [vmem:[%s5 + $0x68] sm:$0xff]
    %v80 = vld [vmem:[%s5 + $0x70] sm:$0xff]
    %v81 = vld [vmem:[%s5 + $0x78] sm:$0xff]
    %v82 = vld [vmem:[%s6] sm:$0x1]
    %v83 = vld [vmem:[%s7] sm:$0xff]
    %v84 = vld [vmem:[%s7 + $0x8] sm:$0xff]
    %v85 = vld [vmem:[%s9] sm:$0xff]
    %v86 = vld [vmem:[%s9 + $0x8] sm:$0xff]
    %v87 = vld [vmem:[%s10] sm:$0x1]
    %v88 = vld [vmem:[%s11] sm:$0xff]
    %v89 = vld [vmem:[%s11 + $0x8] sm:$0xff]
    %v90 = vld [vmem:[%s11 + $0x10] sm:$0xff]
    %v91 = vld [vmem:[%s11 + $0x18] sm:$0xff]
    %v92 = vld [vmem:[%s11 + $0x20] sm:$0xff]
    %v93 = vld [vmem:[%s11 + $0x28] sm:$0xff]
    %v94 = vld [vmem:[%s11 + $0x30] sm:$0xff]
    %v95 = vld [vmem:[%s11 + $0x38] sm:$0xff]
    %v96 = vld [vmem:[%s11 + $0x40] sm:$0xff]
    %v97 = vld [vmem:[%s11 + $0x48] sm:$0xff]
    %v98 = vld [vmem:[%s11 + $0x50] sm:$0xff]
    %v99 = vld [vmem:[%s11 + $0x58] sm:$0xff]
    %v100 = vld [vmem:[%s11 + $0x60] sm:$0xff]
    %v101 = vld [vmem:[%s11 + $0x68] sm:$0xff]
    %v102 = vld [vmem:[%s11 + $0x70] sm:$0xff]
    %v103 = vld [vmem:[%s11 + $0x78] sm:$0xff]
    %v104 = vld [vmem:[%s12] sm:$0x1]
    %v105 = vld [vmem:[%s13] sm:$0xff]
    %v106 = vld [vmem:[%s13 + $0x8] sm:$0xff]
    %v107 = vld [vmem:[%s13 + $0x10] sm:$0x1]
    %v108 = vld [vmem:[%s14] sm:$0x1]
    %v109 = vld [vmem:[%s8] sm:$0xff]
    %v110 = vld [vmem:[%s8 + $0x8] sm:$0xff]
    %vm111 = vcmask 261120
    %v113 = vsel %vm111, %v54, 0
    %v116 = vsel %vm111, %v55, 0
    %v119 = vsel %vm111, %v109, 0
    %v122 = vsel %vm111, %v110, 0
    %124 = vmatpush.xpose.msra.mxu0 0.0
    %125 = vmatpush.xpose.msra.mxu0 0.0
    %126 = vmatpush.xpose.msra.mxu0 0.0
    %127 = vmatpush.xpose.msra.mxu0 0.0
    %128 = vmatpush.xpose.msra.mxu0 0.0
    %129 = vmatpush.xpose.msra.mxu0 0.0
    %130 = vmatpush.xpose.msra.mxu0 0.0
    %131 = vmatpush.xpose.msra.mxu0 0.0
    %132 = vmatpush.xpose.msra.mxu0 0.0
    %133 = vmatpush.xpose.msra.mxu0 0.0
    %134 = vmatpush.xpose.msra.mxu0 0.0
    %135 = vmatpush.xpose.msra.mxu0 0.0
    %136 = vmatpush.xpose.msra.mxu0 0.0
    %137 = vmatpush.xpose.msra.mxu0 0.0
    %138 = vmatpush.xpose.msra.mxu0 %v122
    %139 = vmatpush.xpose.msra.mxu0 %v119
    %140 = vmatmul.f32.gmra.mxu0 %v113
    %v141 = vpop.f32.mrf.mxu0
    %v142 = vadd.f32 0.0, %v141
    %143 = vmatmul.f32.gmra.mxu0 %v116
    %v144 = vpop.f32.mrf.mxu0
    %v145 = vadd.f32 0.0, %v144
    %146 = vdwg.mxu0
    %v147 = vld [vmem:[%s2] sm:$0x3]
    %vm148 = vcmask 130048
    %v150 = vsel %vm148, %v147, 0
    %v153 = vsel %vm148, %v58, 0
    %v156 = vsel %vm148, %v59, 0
    %v159 = vsel %vm148, %v60, 0
    %v162 = vsel %vm148, %v61, 0
    %164 = vmatpush.xpose.msra.mxu0 0.0
    %165 = vmatpush.xpose.msra.mxu0 0.0
    %166 = vmatpush.xpose.msra.mxu0 0.0
    %167 = vmatpush.xpose.msra.mxu0 0.0
    %168 = vmatpush.xpose.msra.mxu0 0.0
    %169 = vmatpush.xpose.msra.mxu0 0.0
    %170 = vmatpush.xpose.msra.mxu0 0.0
    %171 = vmatpush.xpose.msra.mxu0 0.0
    %172 = vmatpush.xpose.msra.mxu0 0.0
    %173 = vmatpush.xpose.msra.mxu0 0.0
    %174 = vmatpush.xpose.msra.mxu0 0.0
    %175 = vmatpush.xpose.msra.mxu0 0.0
    %176 = vmatpush.xpose.msra.mxu0 %v162
    %177 = vmatpush.xpose.msra.mxu0 %v159
    %178 = vmatpush.xpose.msra.mxu0 %v156
    %179 = vmatpush.xpose.msra.mxu0 %v153
    %180 = vmatmul.f32.gmra.mxu0 %v150
    %v181 = vpop.f32.mrf.mxu0
    %v182 = vadd.f32 0.0, %v181
    %183 = vdwg.mxu0
    %v184 = vmax.f32 %v182, 0.0
    %v186 = vsel %vm111, %v184, 0
    %v189 = vsel %vm111, %v62, 0
    %v192 = vsel %vm111, %v63, 0
    %v195 = vsel %vm111, %v64, 0
    %v198 = vsel %vm111, %v65, 0
    %200 = vmatpush.xpose.msra.mxu0 0.0
    %201 = vmatpush.xpose.msra.mxu0 0.0
    %202 = vmatpush.xpose.msra.mxu0 0.0
    %203 = vmatpush.xpose.msra.mxu0 0.0
    %204 = vmatpush.xpose.msra.mxu0 0.0
    %205 = vmatpush.xpose.msra.mxu0 0.0
    %206 = vmatpush.xpose.msra.mxu0 0.0
    %207 = vmatpush.xpose.msra.mxu0 0.0
    %208 = vmatpush.xpose.msra.mxu0 0.0
    %209 = vmatpush.xpose.msra.mxu0 0.0
    %210 = vmatpush.xpose.msra.mxu0 0.0
    %211 = vmatpush.xpose.msra.mxu0 0.0
    %212 = vmatpush.xpose.msra.mxu0 %v198
    %213 = vmatpush.xpose.msra.mxu0 %v195
    %214 = vmatpush.xpose.msra.mxu0 %v192
    %215 = vmatpush.xpose.msra.mxu0 %v189
    %216 = vmatmul.f32.gmra.mxu0 %v186
    %v217 = vpop.f32.mrf.mxu0
    %v218 = vadd.f32 0.0, %v217
    %219 = vdwg.mxu0
    %v220 = vmax.f32 %v218, 0.0
    %v221 = vsel %vm111, %v220, 0.0
    %vm222 = vcmask 523264
    %v223 = vsel %vm222, %v221, 0.0
    %v225 = vperm.slane %v82, 0
    %vm227 = vcmask 785408
    %v229 = vsel %vm227, %v223, 0
    %v232 = vsel %vm227, %v66, 0
    %v235 = vsel %vm227, %v67, 0
    %v238 = vsel %vm227, %v68, 0
    %v241 = vsel %vm227, %v69, 0
    %v244 = vsel %vm227, %v70, 0
    %v247 = vsel %vm227, %v71, 0
    %v250 = vsel %vm227, %v72, 0
    %v253 = vsel %vm227, %v73, 0
    %v256 = vsel %vm227, %v74, 0
    %v259 = vsel %vm227, %v75, 0
    %v262 = vsel %vm227, %v76, 0
    %v265 = vsel %vm227, %v77, 0
    %v268 = vsel %vm227, %v78, 0
    %v271 = vsel %vm227, %v79, 0
    %v274 = vsel %vm227, %v80, 0
    %v277 = vsel %vm227, %v81, 0
    %279 = vmatpush.xpose.msra.mxu0 %v277
    %280 = vmatpush.xpose.msra.mxu0 %v274
    %281 = vmatpush.xpose.msra.mxu0 %v271
    %282 = vmatpush.xpose.msra.mxu0 %v268
    %283 = vmatpush.xpose.msra.mxu0 %v265
    %284 = vmatpush.xpose.msra.mxu0 %v262
    %285 = vmatpush.xpose.msra.mxu0 %v259
    %286 = vmatpush.xpose.msra.mxu0 %v256
    %287 = vmatpush.xpose.msra.mxu0 %v253
    %288 = vmatpush.xpose.msra.mxu0 %v250
    %289 = vmatpush.xpose.msra.mxu0 %v247
    %290 = vmatpush.xpose.msra.mxu0 %v244
    %291 = vmatpush.xpose.msra.mxu0 %v241
    %292 = vmatpush.xpose.msra.mxu0 %v238
    %293 = vmatpush.xpose.msra.mxu0 %v235
    %294 = vmatpush.xpose.msra.mxu0 %v232
    %295 = vmatmul.f32.gmra.mxu0 %v229
    %v296 = vpop.f32.mrf.mxu0
    %v297 = vadd.f32 %v225, %v296
    %298 = vdwg.mxu0
    %v299 = vxor.u32 %v297, 2147483648
    %v300 = vmul.f32 %v299, 1.442695
    %v301 = vpow.pop %v300
    %v302 = vadd.f32 %v301, 1.0
    %v303 = vrcp.pop %v302
    %v304 = vmul.f32 %v302, %v303
    %v305 = vsub.f32 1.0, %v304
    %v306 = vmul.f32 %v303, %v305
    %v307 = vadd.f32 %v303, %v306
    %vm308 = vweird.f32 %v302
    %vm309 = vweird.f32 %v303
    %vm310 = vmor %vm308, %vm309
    %v311 = vsel %vm310, %v303, %v307
    %v312 = vand.u32 2147483647, %v302
    %vm313 = vcmp.eq.f32.partialorder %v312, 8.507059e+37
    %v314 = vand.u32 %v302, 2147483648
    %v315 = vor.u32 1.1754944e-38, %v314
    %v316 = vsel %vm313, %v315, %v311
    %v317 = vmul.f32 1.0, %v316
    %v318 = vtanh.pop %v297
    %v319 = vmul.f32 %v317, 0.0
    %321 = vrot.lane.b32.xlu0 %v318, 64
    %v322 = vpop.permute.xlu0 %321
    %v324 = vmul.f32 %v317, %v322
    %326 = vrot.lane.b32.xlu0 %v324, 32
    %v327 = vpop.permute.xlu0 %326
    %v329 = vadd.f32 %v319, %v327
    %v330 = vtanh.pop %v329
    %332 = vrot.lane.b32.xlu0 %v330, 64
    %v333 = vpop.permute.xlu0 %332
    %v335 = vmul.f32 %v317, %v333
    %337 = vrot.lane.b32.xlu0 %v335, 32
    %v338 = vpop.permute.xlu0 %337
    %v339 = vsel %vm111, %v338, 0
    %v342 = vsel %vm111, %v83, 0
    %v345 = vsel %vm111, %v84, 0
    %347 = vmatpush.xpose.msra.mxu0 0.0
    %348 = vmatpush.xpose.msra.mxu0 0.0
    %349 = vmatpush.xpose.msra.mxu0 0.0
    %350 = vmatpush.xpose.msra.mxu0 0.0
    %351 = vmatpush.xpose.msra.mxu0 0.0
    %352 = vmatpush.xpose.msra.mxu0 0.0
    %353 = vmatpush.xpose.msra.mxu0 0.0
    %354 = vmatpush.xpose.msra.mxu0 0.0
    %355 = vmatpush.xpose.msra.mxu0 0.0
    %356 = vmatpush.xpose.msra.mxu0 0.0
    %357 = vmatpush.xpose.msra.mxu0 0.0
    %358 = vmatpush.xpose.msra.mxu0 0.0
    %359 = vmatpush.xpose.msra.mxu0 0.0
    %360 = vmatpush.xpose.msra.mxu0 0.0
    %361 = vmatpush.xpose.msra.mxu0 %v345
    %362 = vmatpush.xpose.msra.mxu0 %v342
    %363 = vmatmul.f32.gmra.mxu0 %v339
    %v364 = vpop.f32.mrf.mxu0
    %v365 = vadd.f32 0.0, %v364
    %366 = vdwg.mxu0
    %v368 = vsel %vm148, 0.0, 0
    %370 = vmatpush.msra.mxu0 0.0
    %371 = vmatpush.msra.mxu0 0.0
    %372 = vmatpush.msra.mxu0 0.0
    %373 = vmatpush.msra.mxu0 0.0
    %374 = vmatpush.msra.mxu0 0.0
    %375 = vmatpush.msra.mxu0 0.0
    %376 = vmatpush.msra.mxu0 0.0
    %377 = vmatpush.msra.mxu0 0.0
    %378 = vmatpush.msra.mxu0 0.0
    %379 = vmatpush.msra.mxu0 0.0
    %380 = vmatpush.msra.mxu0 0.0
    %381 = vmatpush.msra.mxu0 0.0
    %382 = vmatpush.msra.mxu0 0.0
    %383 = vmatpush.msra.mxu0 0.0
    %384 = vmatpush.msra.mxu0 %v86
    %385 = vmatpush.msra.mxu0 %v85
    %386 = vmatmul.f32.gmra.mxu0 %v368
    %v387 = vpop.f32.mrf.mxu0
    %v388 = vadd.f32 0.0, %v387
    %389 = vdwg.mxu0
    %391 = vrot.lane.b32.xlu0 %v388, 112
    %v392 = vpop.permute.xlu0 %391
    %394 = vrot.lane.b32.xlu0 %v388, 96
    %v395 = vpop.permute.xlu0 %394
    %397 = vrot.lane.b32.xlu0 %v388, 80
    %v398 = vpop.permute.xlu0 %397
    %400 = vrot.lane.b32.xlu0 %v388, 64
    %v401 = vpop.permute.xlu0 %400
    %403 = vrot.lane.b32.xlu0 %v388, 48
    %v404 = vpop.permute.xlu0 %403
    %406 = vrot.lane.b32.xlu0 %v388, 32
    %v407 = vpop.permute.xlu0 %406
    %409 = vrot.lane.b32.xlu0 %v388, 16
    %v410 = vpop.permute.xlu0 %409
    %v412 = vrot.slane %v395, 4
    %vm413 = vcmask 1047556
    %v414 = vsel %vm413, %v412, %v388
    %v416 = vunpack.c.l.s4 1983009808
    %v417 = vunpack.c.0.s8 %v416
    %v418 = vperm.slane %v414, %v417
    %v419 = vrot.slane %v398, 4
    %v420 = vsel %vm413, %v419, %v392
    %v422 = vunpack.c.l.s4 1983009808
    %v423 = vunpack.c.0.s8 %v422
    %v424 = vperm.slane %v420, %v423
    %v425 = vrot.slane %v407, 4
    %v426 = vsel %vm413, %v425, %v401
    %v428 = vunpack.c.l.s4 1983009808
    %v429 = vunpack.c.0.s8 %v428
    %v430 = vperm.slane %v426, %v429
    %v431 = vrot.slane %v410, 4
    %v432 = vsel %vm413, %v431, %v404
    %v434 = vunpack.c.l.s4 1983009808
    %v435 = vunpack.c.0.s8 %v434
    %v436 = vperm.slane %v432, %v435
    %v437 = vrot.slane %v424, 4
    %v438 = vsel %vm413, %v437, %v418
    %v440 = vunpack.c.l.s4 1934713408
    %v441 = vunpack.c.0.s8 %v440
    %v442 = vperm.slane %v438, %v441
    %v443 = vrot.slane %v436, 4
    %v444 = vsel %vm413, %v443, %v430
    %v446 = vunpack.c.l.s4 1934713408
    %v447 = vunpack.c.0.s8 %v446
    %v448 = vperm.slane %v444, %v447
    %v449 = vrot.slane %v448, 4
    %v450 = vsel %vm413, %v449, %v442
    %v451 = vrot.slane %v442, 4
    %v452 = vsel %vm413, %v448, %v451
    %v454 = vrot.slane %v365, 1
    %v455 = vperm.slane %v365, 0
    %v456 = vperm.slane %v454, 0
    %v459 = vadd.f32 %v455, %v450
    %v460 = vadd.f32 %v456, %v452
    %v461 = vadd.f32 %v459, %v142
    %v462 = vadd.f32 %v460, %v145
    %v463 = vtanh.pop %v461
    %v464 = vtanh.pop %v462
    %v466 = vperm.slane %v87, 0
    %v468 = vmul.f32 %v463, %v466
    %v469 = vmul.f32 %v464, %v466
    %v470 = vsel %vm148, %v468, 0.0
    %471 = vadd.xlane.f32.xlu0 %v470
    %v472 = vpop.xlane.xlu0 %471
    %v473 = vsel %vm148, %v469, 0.0
    %474 = vadd.xlane.f32.xlu0 %v473
    %v475 = vpop.xlane.xlu0 %474
    %v478 = vlaneseq
    %v479 = vand.u32 %v478, 127
    %v480 = vperm.slane %v472, %v479
    %v481 = vperm.slane %v475, %v479
    %vm482 = vcmask 1041409
    %v483 = vsel %vm482, %v481, %v480
    %v485 = vsel %vm57, %v483, -1e+30
    %vm486 = vcmask 58368
    %v487 = vsel %vm486, %v485, -inf
    %488 = vmax.xlane.f32.xlu0 %v487
    %v489 = vpop.xlane.xlu0 %488
    %v490 = vsub.f32 %v485, %v489
    %v491 = vmul.f32 %v490, 1.442695
    %v492 = vpow.pop %v491
    %v493 = vsel %vm486, %v492, 0.0
    %494 = vadd.xlane.f32.xlu0 %v493
    %v495 = vpop.xlane.xlu0 %494
    %v496 = vrcp.pop %v495
    %v497 = vmul.f32 %v492, %v496
    %v498 = vperm.slane %v497, 0
    %v499 = vlaneseq
    %v500 = vshrl.u32 %v499, 7
    %502 = vset.pattern.permute.xlu0 %v500
    %503 = vperm.xlu0 %502, %v498
    %v504 = vpop.permute.xlu0 %503
    %v505 = vperm.slane %v497, 1
    %v506 = vlaneseq
    %v507 = vshrl.u32 %v506, 7
    %509 = vset.pattern.permute.xlu0 %v507
    %510 = vperm.xlu0 %509, %v505
    %v511 = vpop.permute.xlu0 %510
    %v512 = vmul.f32 %v504, %v54
    %v513 = vmul.f32 %v511, %v55
    %v514 = vsel %vm111, %v512, 0.0
    %v515 = vrot.slane %v514, 4
    %v516 = vadd.f32 %v514, %v515
    %v517 = vrot.slane %v516, 2
    %v518 = vadd.f32 %v516, %v517
    %v519 = vrot.slane %v518, 1
    %v520 = vadd.f32 %v518, %v519
    %v521 = vsel %vm111, %v513, 0.0
    %v522 = vrot.slane %v521, 4
    %v523 = vadd.f32 %v521, %v522
    %v524 = vrot.slane %v523, 2
    %v525 = vadd.f32 %v523, %v524
    %v526 = vrot.slane %v525, 1
    %v527 = vadd.f32 %v525, %v526
    %v528 = vadd.f32 %v497, 0.0
    %v532 = vsel %vm482, %v527, %v520
    %533 = vrot.lane.b32.xlu0 %v532, 32
    %v534 = vpop.permute.xlu0 %533
    %v536 = vsel %vm111, %v338, %v534
    %v537 = vsel %vm222, %v536, 0.0
    %v539 = vperm.slane %v104, 0
    %v542 = vsel %vm227, %v537, 0
    %v545 = vsel %vm227, %v88, 0
    %v548 = vsel %vm227, %v89, 0
    %v551 = vsel %vm227, %v90, 0
    %v554 = vsel %vm227, %v91, 0
    %v557 = vsel %vm227, %v92, 0
    %v560 = vsel %vm227, %v93, 0
    %v563 = vsel %vm227, %v94, 0
    %v566 = vsel %vm227, %v95, 0
    %v569 = vsel %vm227, %v96, 0
    %v572 = vsel %vm227, %v97, 0
    %v575 = vsel %vm227, %v98, 0
    %v578 = vsel %vm227, %v99, 0
    %v581 = vsel %vm227, %v100, 0
    %v584 = vsel %vm227, %v101, 0
    %v587 = vsel %vm227, %v102, 0
    %v590 = vsel %vm227, %v103, 0
    %592 = vmatpush.xpose.msra.mxu0 %v590
    %593 = vmatpush.xpose.msra.mxu0 %v587
    %594 = vmatpush.xpose.msra.mxu0 %v584
    %595 = vmatpush.xpose.msra.mxu0 %v581
    %596 = vmatpush.xpose.msra.mxu0 %v578
    %597 = vmatpush.xpose.msra.mxu0 %v575
    %598 = vmatpush.xpose.msra.mxu0 %v572
    %599 = vmatpush.xpose.msra.mxu0 %v569
    %600 = vmatpush.xpose.msra.mxu0 %v566
    %601 = vmatpush.xpose.msra.mxu0 %v563
    %602 = vmatpush.xpose.msra.mxu0 %v560
    %603 = vmatpush.xpose.msra.mxu0 %v557
    %604 = vmatpush.xpose.msra.mxu0 %v554
    %605 = vmatpush.xpose.msra.mxu0 %v551
    %606 = vmatpush.xpose.msra.mxu0 %v548
    %607 = vmatpush.xpose.msra.mxu0 %v545
    %608 = vmatmul.f32.gmra.mxu0 %v542
    %v609 = vpop.f32.mrf.mxu0
    %v610 = vadd.f32 %v539, %v609
    %611 = vdwg.mxu0
    %v612 = vxor.u32 %v610, 2147483648
    %v613 = vmul.f32 %v612, 1.442695
    %v614 = vpow.pop %v613
    %v615 = vadd.f32 %v614, 1.0
    %v616 = vrcp.pop %v615
    %v617 = vmul.f32 %v615, %v616
    %v618 = vsub.f32 1.0, %v617
    %v619 = vmul.f32 %v616, %v618
    %v620 = vadd.f32 %v616, %v619
    %vm621 = vweird.f32 %v615
    %vm622 = vweird.f32 %v616
    %vm623 = vmor %vm621, %vm622
    %v624 = vsel %vm623, %v616, %v620
    %v625 = vand.u32 2147483647, %v615
    %vm626 = vcmp.eq.f32.partialorder %v625, 8.507059e+37
    %v627 = vand.u32 %v615, 2147483648
    %v628 = vor.u32 1.1754944e-38, %v627
    %v629 = vsel %vm626, %v628, %v624
    %v630 = vmul.f32 1.0, %v629
    %v631 = vtanh.pop %v610
    %v632 = vmul.f32 %v630, 0.0
    %634 = vrot.lane.b32.xlu0 %v631, 64
    %v635 = vpop.permute.xlu0 %634
    %v637 = vmul.f32 %v630, %v635
    %639 = vrot.lane.b32.xlu0 %v637, 32
    %v640 = vpop.permute.xlu0 %639
    %v642 = vadd.f32 %v632, %v640
    %v643 = vtanh.pop %v642
    %645 = vrot.lane.b32.xlu0 %v643, 64
    %v646 = vpop.permute.xlu0 %645
    %v648 = vmul.f32 %v630, %v646
    %650 = vrot.lane.b32.xlu0 %v648, 32
    %v651 = vpop.permute.xlu0 %650
    %v653 = vsel %vm111, %v651, %v534
    %v655 = vperm.slane %v108, 0
    %v658 = vsel %vm222, %v653, 0
    %v661 = vsel %vm222, %v105, 0
    %v664 = vsel %vm222, %v106, 0
    %v667 = vsel %vm222, %v107, 0
    %669 = vmatpush.xpose.msra.mxu0 0.0
    %670 = vmatpush.xpose.msra.mxu0 0.0
    %671 = vmatpush.xpose.msra.mxu0 0.0
    %672 = vmatpush.xpose.msra.mxu0 0.0
    %673 = vmatpush.xpose.msra.mxu0 0.0
    %674 = vmatpush.xpose.msra.mxu0 0.0
    %675 = vmatpush.xpose.msra.mxu0 0.0
    %676 = vmatpush.xpose.msra.mxu0 0.0
    %677 = vmatpush.xpose.msra.mxu0 0.0
    %678 = vmatpush.xpose.msra.mxu0 0.0
    %679 = vmatpush.xpose.msra.mxu0 0.0
    %680 = vmatpush.xpose.msra.mxu0 0.0
    %681 = vmatpush.xpose.msra.mxu0 0.0
    %682 = vmatpush.xpose.msra.mxu0 %v667
    %683 = vmatpush.xpose.msra.mxu0 %v664
    %684 = vmatpush.xpose.msra.mxu0 %v661
    %685 = vmatmul.f32.gmra.mxu0 %v658
    %v686 = vpop.f32.mrf.mxu0
    %v687 = vadd.f32 %v655, %v686
    %688 = vdwg.mxu0
    %vm689 = vcmask 132096
    %690 = vst.msk [vmem:[%s15] sm:$0x3] %vm689, %v687
    %691 = vst.msk [vmem:[%s16] sm:$0x3] %vm486, %v497
    %vm693 = vcmask 254976
    %694 = vst.msk [vmem:[#allocation2] sm:$0x3] %vm693, %v532
    %s695 = scalar_lea.vmem %s2, 2
    %v696 = vld [vmem:[%s695] sm:$0x3]
    %v698 = vsel %vm148, %v696, 0
    %700 = vmatpush.xpose.msra.mxu0 0.0
    %701 = vmatpush.xpose.msra.mxu0 0.0
    %702 = vmatpush.xpose.msra.mxu0 0.0
    %703 = vmatpush.xpose.msra.mxu0 0.0
    %704 = vmatpush.xpose.msra.mxu0 0.0
    %705 = vmatpush.xpose.msra.mxu0 0.0
    %706 = vmatpush.xpose.msra.mxu0 0.0
    %707 = vmatpush.xpose.msra.mxu0 0.0
    %708 = vmatpush.xpose.msra.mxu0 0.0
    %709 = vmatpush.xpose.msra.mxu0 0.0
    %710 = vmatpush.xpose.msra.mxu0 0.0
    %711 = vmatpush.xpose.msra.mxu0 0.0
    %712 = vmatpush.xpose.msra.mxu0 %v162
    %713 = vmatpush.xpose.msra.mxu0 %v159
    %714 = vmatpush.xpose.msra.mxu0 %v156
    %715 = vmatpush.xpose.msra.mxu0 %v153
    %716 = vmatmul.f32.gmra.mxu0 %v698
    %v717 = vpop.f32.mrf.mxu0
    %v718 = vadd.f32 0.0, %v717
    %719 = vdwg.mxu0
    %v720 = vmax.f32 %v718, 0.0
    %v722 = vsel %vm111, %v720, 0
    %724 = vmatpush.xpose.msra.mxu0 0.0
    %725 = vmatpush.xpose.msra.mxu0 0.0
    %726 = vmatpush.xpose.msra.mxu0 0.0
    %727 = vmatpush.xpose.msra.mxu0 0.0
    %728 = vmatpush.xpose.msra.mxu0 0.0
    %729 = vmatpush.xpose.msra.mxu0 0.0
    %730 = vmatpush.xpose.msra.mxu0 0.0
    %731 = vmatpush.xpose.msra.mxu0 0.0
    %732 = vmatpush.xpose.msra.mxu0 0.0
    %733 = vmatpush.xpose.msra.mxu0 0.0
    %734 = vmatpush.xpose.msra.mxu0 0.0
    %735 = vmatpush.xpose.msra.mxu0 0.0
    %736 = vmatpush.xpose.msra.mxu0 %v198
    %737 = vmatpush.xpose.msra.mxu0 %v195
    %738 = vmatpush.xpose.msra.mxu0 %v192
    %739 = vmatpush.xpose.msra.mxu0 %v189
    %740 = vmatmul.f32.gmra.mxu0 %v722
    %v741 = vpop.f32.mrf.mxu0
    %v742 = vadd.f32 0.0, %v741
    %743 = vdwg.mxu0
    %v744 = vmax.f32 %v742, 0.0
    %745 = vrot.lane.b32.xlu0 %v335, 96
    %v746 = vpop.permute.xlu0 %745
    %v748 = vsel %vm111, %v744, %v534
    %v749 = vsel %vm222, %v748, %v746
    %v751 = vsel %vm227, %v749, 0
    %753 = vmatpush.xpose.msra.mxu0 %v277
    %754 = vmatpush.xpose.msra.mxu0 %v274
    %755 = vmatpush.xpose.msra.mxu0 %v271
    %756 = vmatpush.xpose.msra.mxu0 %v268
    %757 = vmatpush.xpose.msra.mxu0 %v265
    %758 = vmatpush.xpose.msra.mxu0 %v262
    %759 = vmatpush.xpose.msra.mxu0 %v259
    %760 = vmatpush.xpose.msra.mxu0 %v256
    %761 = vmatpush.xpose.msra.mxu0 %v253
    %762 = vmatpush.xpose.msra.mxu0 %v250
    %763 = vmatpush.xpose.msra.mxu0 %v247
    %764 = vmatpush.xpose.msra.mxu0 %v244
    %765 = vmatpush.xpose.msra.mxu0 %v241
    %766 = vmatpush.xpose.msra.mxu0 %v238
    %767 = vmatpush.xpose.msra.mxu0 %v235
    %768 = vmatpush.xpose.msra.mxu0 %v232
    %769 = vmatmul.f32.gmra.mxu0 %v751
    %v770 = vpop.f32.mrf.mxu0
    %v771 = vadd.f32 %v225, %v770
    %772 = vdwg.mxu0
    %v773 = vxor.u32 %v771, 2147483648
    %v774 = vmul.f32 %v773, 1.442695
    %v775 = vpow.pop %v774
    %v776 = vadd.f32 %v775, 1.0
    %v777 = vrcp.pop %v776
    %v778 = vmul.f32 %v776, %v777
    %v779 = vsub.f32 1.0, %v778
    %v780 = vmul.f32 %v777, %v779
    %v781 = vadd.f32 %v777, %v780
    %vm782 = vweird.f32 %v776
    %vm783 = vweird.f32 %v777
    %vm784 = vmor %vm782, %vm783
    %v785 = vsel %vm784, %v777, %v781
    %v786 = vand.u32 2147483647, %v776
    %vm787 = vcmp.eq.f32.partialorder %v786, 8.507059e+37
    %v788 = vand.u32 %v776, 2147483648
    %v789 = vor.u32 1.1754944e-38, %v788
    %v790 = vsel %vm787, %v789, %v785
    %v791 = vmul.f32 1.0, %v790
    %v792 = vtanh.pop %v771
    %v793 = vmul.f32 %v791, %v329
    %795 = vrot.lane.b32.xlu0 %v792, 64
    %v796 = vpop.permute.xlu0 %795
    %v798 = vmul.f32 %v791, %v796
    %800 = vrot.lane.b32.xlu0 %v798, 32
    %v801 = vpop.permute.xlu0 %800
    %v803 = vadd.f32 %v793, %v801
    %v804 = vtanh.pop %v803
    %806 = vrot.lane.b32.xlu0 %v804, 64
    %v807 = vpop.permute.xlu0 %806
    %v809 = vmul.f32 %v791, %v807
    %811 = vrot.lane.b32.xlu0 %v809, 32
    %v812 = vpop.permute.xlu0 %811
    %v813 = vsel %vm111, %v812, 0
    %815 = vmatpush.xpose.msra.mxu0 0.0
    %816 = vmatpush.xpose.msra.mxu0 0.0
    %817 = vmatpush.xpose.msra.mxu0 0.0
    %818 = vmatpush.xpose.msra.mxu0 0.0
    %819 = vmatpush.xpose.msra.mxu0 0.0
    %820 = vmatpush.xpose.msra.mxu0 0.0
    %821 = vmatpush.xpose.msra.mxu0 0.0
    %822 = vmatpush.xpose.msra.mxu0 0.0
    %823 = vmatpush.xpose.msra.mxu0 0.0
    %824 = vmatpush.xpose.msra.mxu0 0.0
    %825 = vmatpush.xpose.msra.mxu0 0.0
    %826 = vmatpush.xpose.msra.mxu0 0.0
    %827 = vmatpush.xpose.msra.mxu0 0.0
    %828 = vmatpush.xpose.msra.mxu0 0.0
    %829 = vmatpush.xpose.msra.mxu0 %v345
    %830 = vmatpush.xpose.msra.mxu0 %v342
    %831 = vmatmul.f32.gmra.mxu0 %v813
    %v832 = vpop.f32.mrf.mxu0
    %v833 = vadd.f32 0.0, %v832
    %834 = vdwg.mxu0
    %836 = vrot.lane.b32.xlu0 %v528, 8
    %v837 = vpop.permute.xlu0 %836
    %vm839 = vcmask 64512
    %v840 = vsel %vm839, %v497, %v837
    %v842 = vsel %vm148, %v840, 0
    %844 = vmatpush.msra.mxu0 0.0
    %845 = vmatpush.msra.mxu0 0.0
    %846 = vmatpush.msra.mxu0 0.0
    %847 = vmatpush.msra.mxu0 0.0
    %848 = vmatpush.msra.mxu0 0.0
    %849 = vmatpush.msra.mxu0 0.0
    %850 = vmatpush.msra.mxu0 0.0
    %851 = vmatpush.msra.mxu0 0.0
    %852 = vmatpush.msra.mxu0 0.0
    %853 = vmatpush.msra.mxu0 0.0
    %854 = vmatpush.msra.mxu0 0.0
    %855 = vmatpush.msra.mxu0 0.0
    %856 = vmatpush.msra.mxu0 0.0
    %857 = vmatpush.msra.mxu0 0.0
    %858 = vmatpush.msra.mxu0 %v86
    %859 = vmatpush.msra.mxu0 %v85
    %860 = vmatmul.f32.gmra.mxu0 %v842
    %v861 = vpop.f32.mrf.mxu0
    %v862 = vadd.f32 0.0, %v861
    %863 = vdwg.mxu0
    %865 = vrot.lane.b32.xlu0 %v862, 112
    %v866 = vpop.permute.xlu0 %865
    %868 = vrot.lane.b32.xlu0 %v862, 96
    %v869 = vpop.permute.xlu0 %868
    %871 = vrot.lane.b32.xlu0 %v862, 80
    %v872 = vpop.permute.xlu0 %871
    %874 = vrot.lane.b32.xlu0 %v862, 64
    %v875 = vpop.permute.xlu0 %874
    %877 = vrot.lane.b32.xlu0 %v862, 48
    %v878 = vpop.permute.xlu0 %877
    %880 = vrot.lane.b32.xlu0 %v862, 32
    %v881 = vpop.permute.xlu0 %880
    %883 = vrot.lane.b32.xlu0 %v862, 16
    %v884 = vpop.permute.xlu0 %883
    %v886 = vrot.slane %v869, 4
    %v887 = vsel %vm413, %v886, %v862
    %v889 = vunpack.c.l.s4 1983009808
    %v890 = vunpack.c.0.s8 %v889
    %v891 = vperm.slane %v887, %v890
    %v892 = vrot.slane %v872, 4
    %v893 = vsel %vm413, %v892, %v866
    %v895 = vunpack.c.l.s4 1983009808
    %v896 = vunpack.c.0.s8 %v895
    %v897 = vperm.slane %v893, %v896
    %v898 = vrot.slane %v881, 4
    %v899 = vsel %vm413, %v898, %v875
    %v901 = vunpack.c.l.s4 1983009808
    %v902 = vunpack.c.0.s8 %v901
    %v903 = vperm.slane %v899, %v902
    %v904 = vrot.slane %v884, 4
    %v905 = vsel %vm413, %v904, %v878
    %v907 = vunpack.c.l.s4 1983009808
    %v908 = vunpack.c.0.s8 %v907
    %v909 = vperm.slane %v905, %v908
    %v910 = vrot.slane %v897, 4
    %v911 = vsel %vm413, %v910, %v891
    %v913 = vunpack.c.l.s4 1934713408
    %v914 = vunpack.c.0.s8 %v913
    %v915 = vperm.slane %v911, %v914
    %v916 = vrot.slane %v909, 4
    %v917 = vsel %vm413, %v916, %v903
    %v919 = vunpack.c.l.s4 1934713408
    %v920 = vunpack.c.0.s8 %v919
    %v921 = vperm.slane %v917, %v920
    %v922 = vrot.slane %v921, 4
    %v923 = vsel %vm413, %v922, %v915
    %v924 = vrot.slane %v915, 4
    %v925 = vsel %vm413, %v921, %v924
    %v927 = vrot.slane %v833, 1
    %v928 = vperm.slane %v833, 0
    %v929 = vperm.slane %v927, 0
    %v932 = vadd.f32 %v928, %v923
    %v933 = vadd.f32 %v929, %v925
    %v934 = vadd.f32 %v932, %v142
    %v935 = vadd.f32 %v933, %v145
    %v936 = vtanh.pop %v934
    %v937 = vtanh.pop %v935
    %v938 = vmul.f32 %v936, %v466
    %v939 = vmul.f32 %v937, %v466
    %v940 = vsel %vm148, %v938, 0.0
    %941 = vadd.xlane.f32.xlu0 %v940
    %v942 = vpop.xlane.xlu0 %941
    %v943 = vsel %vm148, %v939, 0.0
    %944 = vadd.xlane.f32.xlu0 %v943
    %v945 = vpop.xlane.xlu0 %944
    %v948 = vperm.slane %v942, %v479
    %v949 = vperm.slane %v945, %v479
    %v950 = vsel %vm482, %v949, %v948
    %v952 = vsel %vm57, %v950, -1e+30
    %v953 = vsel %vm486, %v952, -inf
    %954 = vmax.xlane.f32.xlu0 %v953
    %v955 = vpop.xlane.xlu0 %954
    %v956 = vsub.f32 %v952, %v955
    %v957 = vmul.f32 %v956, 1.442695
    %v958 = vpow.pop %v957
    %v959 = vsel %vm486, %v958, 0.0
    %960 = vadd.xlane.f32.xlu0 %v959
    %v961 = vpop.xlane.xlu0 %960
    %v962 = vrcp.pop %v961
    %v963 = vmul.f32 %v958, %v962
    %v964 = vperm.slane %v963, 0
    %v965 = vlaneseq
    %v966 = vshrl.u32 %v965, 7
    %968 = vset.pattern.permute.xlu0 %v966
    %969 = vperm.xlu0 %968, %v964
    %v970 = vpop.permute.xlu0 %969
    %v971 = vperm.slane %v963, 1
    %v972 = vlaneseq
    %v973 = vshrl.u32 %v972, 7
    %975 = vset.pattern.permute.xlu0 %v973
    %976 = vperm.xlu0 %975, %v971
    %v977 = vpop.permute.xlu0 %976
    %v978 = vmul.f32 %v970, %v54
    %v979 = vmul.f32 %v977, %v55
    %v980 = vsel %vm111, %v978, 0.0
    %v981 = vrot.slane %v980, 4
    %v982 = vadd.f32 %v980, %v981
    %v983 = vrot.slane %v982, 2
    %v984 = vadd.f32 %v982, %v983
    %v985 = vrot.slane %v984, 1
    %v986 = vadd.f32 %v984, %v985
    %v987 = vsel %vm111, %v979, 0.0
    %v988 = vrot.slane %v987, 4
    %v989 = vadd.f32 %v987, %v988
    %v990 = vrot.slane %v989, 2
    %v991 = vadd.f32 %v989, %v990
    %v992 = vrot.slane %v991, 1
    %v993 = vadd.f32 %v991, %v992
    %v994 = vadd.f32 %v528, %v963
    %v998 = vsel %vm482, %v993, %v986
    %999 = vrot.lane.b32.xlu0 %v998, 32
    %v1000 = vpop.permute.xlu0 %999
    %1002 = vrot.lane.b32.xlu0 %v648, 96
    %v1003 = vpop.permute.xlu0 %1002
    %v1005 = vsel %vm111, %v812, %v1000
    %v1006 = vsel %vm222, %v1005, %v1003
    %v1008 = vsel %vm227, %v1006, 0
    %1010 = vmatpush.xpose.msra.mxu0 %v590
    %1011 = vmatpush.xpose.msra.mxu0 %v587
    %1012 = vmatpush.xpose.msra.mxu0 %v584
    %1013 = vmatpush.xpose.msra.mxu0 %v581
    %1014 = vmatpush.xpose.msra.mxu0 %v578
    %1015 = vmatpush.xpose.msra.mxu0 %v575
    %1016 = vmatpush.xpose.msra.mxu0 %v572
    %1017 = vmatpush.xpose.msra.mxu0 %v569
    %1018 = vmatpush.xpose.msra.mxu0 %v566
    %1019 = vmatpush.xpose.msra.mxu0 %v563
    %1020 = vmatpush.xpose.msra.mxu0 %v560
    %1021 = vmatpush.xpose.msra.mxu0 %v557
    %1022 = vmatpush.xpose.msra.mxu0 %v554
    %1023 = vmatpush.xpose.msra.mxu0 %v551
    %1024 = vmatpush.xpose.msra.mxu0 %v548
    %1025 = vmatpush.xpose.msra.mxu0 %v545
    %1026 = vmatmul.f32.gmra.mxu0 %v1008
    %v1027 = vpop.f32.mrf.mxu0
    %v1028 = vadd.f32 %v539, %v1027
    %1029 = vdwg.mxu0
    %v1030 = vxor.u32 %v1028, 2147483648
    %v1031 = vmul.f32 %v1030, 1.442695
    %v1032 = vpow.pop %v1031
    %v1033 = vadd.f32 %v1032, 1.0
    %v1034 = vrcp.pop %v1033
    %v1035 = vmul.f32 %v1033, %v1034
    %v1036 = vsub.f32 1.0, %v1035
    %v1037 = vmul.f32 %v1034, %v1036
    %v1038 = vadd.f32 %v1034, %v1037
    %vm1039 = vweird.f32 %v1033
    %vm1040 = vweird.f32 %v1034
    %vm1041 = vmor %vm1039, %vm1040
    %v1042 = vsel %vm1041, %v1034, %v1038
    %v1043 = vand.u32 2147483647, %v1033
    %vm1044 = vcmp.eq.f32.partialorder %v1043, 8.507059e+37
    %v1045 = vand.u32 %v1033, 2147483648
    %v1046 = vor.u32 1.1754944e-38, %v1045
    %v1047 = vsel %vm1044, %v1046, %v1042
    %v1048 = vmul.f32 1.0, %v1047
    %v1049 = vtanh.pop %v1028
    %v1050 = vmul.f32 %v1048, %v642
    %1052 = vrot.lane.b32.xlu0 %v1049, 64
    %v1053 = vpop.permute.xlu0 %1052
    %v1055 = vmul.f32 %v1048, %v1053
    %1057 = vrot.lane.b32.xlu0 %v1055, 32
    %v1058 = vpop.permute.xlu0 %1057
    %v1060 = vadd.f32 %v1050, %v1058
    %v1061 = vtanh.pop %v1060
    %1063 = vrot.lane.b32.xlu0 %v1061, 64
    %v1064 = vpop.permute.xlu0 %1063
    %v1066 = vmul.f32 %v1048, %v1064
    %1068 = vrot.lane.b32.xlu0 %v1066, 32
    %v1069 = vpop.permute.xlu0 %1068
    %v1071 = vsel %vm111, %v1069, %v1000
    %v1073 = vsel %vm222, %v1071, 0
    %1075 = vmatpush.xpose.msra.mxu0 0.0
    %1076 = vmatpush.xpose.msra.mxu0 0.0
    %1077 = vmatpush.xpose.msra.mxu0 0.0
    %1078 = vmatpush.xpose.msra.mxu0 0.0
    %1079 = vmatpush.xpose.msra.mxu0 0.0
    %1080 = vmatpush.xpose.msra.mxu0 0.0
    %1081 = vmatpush.xpose.msra.mxu0 0.0
    %1082 = vmatpush.xpose.msra.mxu0 0.0
    %1083 = vmatpush.xpose.msra.mxu0 0.0
    %1084 = vmatpush.xpose.msra.mxu0 0.0
    %1085 = vmatpush.xpose.msra.mxu0 0.0
    %1086 = vmatpush.xpose.msra.mxu0 0.0
    %1087 = vmatpush.xpose.msra.mxu0 0.0
    %1088 = vmatpush.xpose.msra.mxu0 %v667
    %1089 = vmatpush.xpose.msra.mxu0 %v664
    %1090 = vmatpush.xpose.msra.mxu0 %v661
    %1091 = vmatmul.f32.gmra.mxu0 %v1073
    %v1092 = vpop.f32.mrf.mxu0
    %v1093 = vadd.f32 %v655, %v1092
    %1094 = vdwg.mxu0
    %s1095 = scalar_lea.vmem %s15, 2
    %1096 = vst.msk [vmem:[%s1095] sm:$0x3] %vm689, %v1093
    %s1097 = scalar_lea.vmem %s16, 2
    %1098 = vst.msk [vmem:[%s1097] sm:$0x3] %vm486, %v963
    %s1100 = scalar_lea.vmem [#allocation2], 2
    %1101 = vst.msk [vmem:[%s1100] sm:$0x3] %vm693, %v998
    %s1102 = scalar_lea.vmem %s2, 4
    %v1103 = vld [vmem:[%s1102] sm:$0x3]
    %v1105 = vsel %vm148, %v1103, 0
    %1107 = vmatpush.xpose.msra.mxu0 0.0
    %1108 = vmatpush.xpose.msra.mxu0 0.0
    %1109 = vmatpush.xpose.msra.mxu0 0.0
    %1110 = vmatpush.xpose.msra.mxu0 0.0
    %1111 = vmatpush.xpose.msra.mxu0 0.0
    %1112 = vmatpush.xpose.msra.mxu0 0.0
    %1113 = vmatpush.xpose.msra.mxu0 0.0
    %1114 = vmatpush.xpose.msra.mxu0 0.0
    %1115 = vmatpush.xpose.msra.mxu0 0.0
    %1116 = vmatpush.xpose.msra.mxu0 0.0
    %1117 = vmatpush.xpose.msra.mxu0 0.0
    %1118 = vmatpush.xpose.msra.mxu0 0.0
    %1119 = vmatpush.xpose.msra.mxu0 %v162
    %1120 = vmatpush.xpose.msra.mxu0 %v159
    %1121 = vmatpush.xpose.msra.mxu0 %v156
    %1122 = vmatpush.xpose.msra.mxu0 %v153
    %1123 = vmatmul.f32.gmra.mxu0 %v1105
    %v1124 = vpop.f32.mrf.mxu0
    %v1125 = vadd.f32 0.0, %v1124
    %1126 = vdwg.mxu0
    %v1127 = vmax.f32 %v1125, 0.0
    %v1129 = vsel %vm111, %v1127, 0
    %1131 = vmatpush.xpose.msra.mxu0 0.0
    %1132 = vmatpush.xpose.msra.mxu0 0.0
    %1133 = vmatpush.xpose.msra.mxu0 0.0
    %1134 = vmatpush.xpose.msra.mxu0 0.0
    %1135 = vmatpush.xpose.msra.mxu0 0.0
    %1136 = vmatpush.xpose.msra.mxu0 0.0
    %1137 = vmatpush.xpose.msra.mxu0 0.0
    %1138 = vmatpush.xpose.msra.mxu0 0.0
    %1139 = vmatpush.xpose.msra.mxu0 0.0
    %1140 = vmatpush.xpose.msra.mxu0 0.0
    %1141 = vmatpush.xpose.msra.mxu0 0.0
    %1142 = vmatpush.xpose.msra.mxu0 0.0
    %1143 = vmatpush.xpose.msra.mxu0 %v198
    %1144 = vmatpush.xpose.msra.mxu0 %v195
    %1145 = vmatpush.xpose.msra.mxu0 %v192
    %1146 = vmatpush.xpose.msra.mxu0 %v189
    %1147 = vmatmul.f32.gmra.mxu0 %v1129
    %v1148 = vpop.f32.mrf.mxu0
    %v1149 = vadd.f32 0.0, %v1148
    %1150 = vdwg.mxu0
    %v1151 = vmax.f32 %v1149, 0.0
    %1152 = vrot.lane.b32.xlu0 %v809, 96
    %v1153 = vpop.permute.xlu0 %1152
    %v1155 = vsel %vm111, %v1151, %v1000
    %v1156 = vsel %vm222, %v1155, %v1153
    %v1158 = vsel %vm227, %v1156, 0
    %1160 = vmatpush.xpose.msra.mxu0 %v277
    %1161 = vmatpush.xpose.msra.mxu0 %v274
    %1162 = vmatpush.xpose.msra.mxu0 %v271
    %1163 = vmatpush.xpose.msra.mxu0 %v268
    %1164 = vmatpush.xpose.msra.mxu0 %v265
    %1165 = vmatpush.xpose.msra.mxu0 %v262
    %1166 = vmatpush.xpose.msra.mxu0 %v259
    %1167 = vmatpush.xpose.msra.mxu0 %v256
    %1168 = vmatpush.xpose.msra.mxu0 %v253
    %1169 = vmatpush.xpose.msra.mxu0 %v250
    %1170 = vmatpush.xpose.msra.mxu0 %v247
    %1171 = vmatpush.xpose.msra.mxu0 %v244
    %1172 = vmatpush.xpose.msra.mxu0 %v241
    %1173 = vmatpush.xpose.msra.mxu0 %v238
    %1174 = vmatpush.xpose.msra.mxu0 %v235
    %1175 = vmatpush.xpose.msra.mxu0 %v232
    %1176 = vmatmul.f32.gmra.mxu0 %v1158
    %v1177 = vpop.f32.mrf.mxu0
    %v1178 = vadd.f32 %v225, %v1177
    %1179 = vdwg.mxu0
    %v1180 = vxor.u32 %v1178, 2147483648
    %v1181 = vmul.f32 %v1180, 1.442695
    %v1182 = vpow.pop %v1181
    %v1183 = vadd.f32 %v1182, 1.0
    %v1184 = vrcp.pop %v1183
    %v1185 = vmul.f32 %v1183, %v1184
    %v1186 = vsub.f32 1.0, %v1185
    %v1187 = vmul.f32 %v1184, %v1186
    %v1188 = vadd.f32 %v1184, %v1187
    %vm1189 = vweird.f32 %v1183
    %vm1190 = vweird.f32 %v1184
    %vm1191 = vmor %vm1189, %vm1190
    %v1192 = vsel %vm1191, %v1184, %v1188
    %v1193 = vand.u32 2147483647, %v1183
    %vm1194 = vcmp.eq.f32.partialorder %v1193, 8.507059e+37
    %v1195 = vand.u32 %v1183, 2147483648
    %v1196 = vor.u32 1.1754944e-38, %v1195
    %v1197 = vsel %vm1194, %v1196, %v1192
    %v1198 = vmul.f32 1.0, %v1197
    %v1199 = vtanh.pop %v1178
    %v1200 = vmul.f32 %v1198, %v803
    %1202 = vrot.lane.b32.xlu0 %v1199, 64
    %v1203 = vpop.permute.xlu0 %1202
    %v1205 = vmul.f32 %v1198, %v1203
    %1207 = vrot.lane.b32.xlu0 %v1205, 32
    %v1208 = vpop.permute.xlu0 %1207
    %v1210 = vadd.f32 %v1200, %v1208
    %v1211 = vtanh.pop %v1210
    %1213 = vrot.lane.b32.xlu0 %v1211, 64
    %v1214 = vpop.permute.xlu0 %1213
    %v1216 = vmul.f32 %v1198, %v1214
    %1218 = vrot.lane.b32.xlu0 %v1216, 32
    %v1219 = vpop.permute.xlu0 %1218
    %v1220 = vsel %vm111, %v1219, 0
    %1222 = vmatpush.xpose.msra.mxu0 0.0
    %1223 = vmatpush.xpose.msra.mxu0 0.0
    %1224 = vmatpush.xpose.msra.mxu0 0.0
    %1225 = vmatpush.xpose.msra.mxu0 0.0
    %1226 = vmatpush.xpose.msra.mxu0 0.0
    %1227 = vmatpush.xpose.msra.mxu0 0.0
    %1228 = vmatpush.xpose.msra.mxu0 0.0
    %1229 = vmatpush.xpose.msra.mxu0 0.0
    %1230 = vmatpush.xpose.msra.mxu0 0.0
    %1231 = vmatpush.xpose.msra.mxu0 0.0
    %1232 = vmatpush.xpose.msra.mxu0 0.0
    %1233 = vmatpush.xpose.msra.mxu0 0.0
    %1234 = vmatpush.xpose.msra.mxu0 0.0
    %1235 = vmatpush.xpose.msra.mxu0 0.0
    %1236 = vmatpush.xpose.msra.mxu0 %v345
    %1237 = vmatpush.xpose.msra.mxu0 %v342
    %1238 = vmatmul.f32.gmra.mxu0 %v1220
    %v1239 = vpop.f32.mrf.mxu0
    %v1240 = vadd.f32 0.0, %v1239
    %1241 = vdwg.mxu0
    %1243 = vrot.lane.b32.xlu0 %v994, 8
    %v1244 = vpop.permute.xlu0 %1243
    %v1246 = vsel %vm839, %v963, %v1244
    %v1248 = vsel %vm148, %v1246, 0
    %1250 = vmatpush.msra.mxu0 0.0
    %1251 = vmatpush.msra.mxu0 0.0
    %1252 = vmatpush.msra.mxu0 0.0
    %1253 = vmatpush.msra.mxu0 0.0
    %1254 = vmatpush.msra.mxu0 0.0
    %1255 = vmatpush.msra.mxu0 0.0
    %1256 = vmatpush.msra.mxu0 0.0
    %1257 = vmatpush.msra.mxu0 0.0
    %1258 = vmatpush.msra.mxu0 0.0
    %1259 = vmatpush.msra.mxu0 0.0
    %1260 = vmatpush.msra.mxu0 0.0
    %1261 = vmatpush.msra.mxu0 0.0
    %1262 = vmatpush.msra.mxu0 0.0
    %1263 = vmatpush.msra.mxu0 0.0
    %1264 = vmatpush.msra.mxu0 %v86
    %1265 = vmatpush.msra.mxu0 %v85
    %1266 = vmatmul.f32.gmra.mxu0 %v1248
    %v1267 = vpop.f32.mrf.mxu0
    %v1268 = vadd.f32 0.0, %v1267
    %1269 = vdwg.mxu0
    %1271 = vrot.lane.b32.xlu0 %v1268, 112
    %v1272 = vpop.permute.xlu0 %1271
    %1274 = vrot.lane.b32.xlu0 %v1268, 96
    %v1275 = vpop.permute.xlu0 %1274
    %1277 = vrot.lane.b32.xlu0 %v1268, 80
    %v1278 = vpop.permute.xlu0 %1277
    %1280 = vrot.lane.b32.xlu0 %v1268, 64
    %v1281 = vpop.permute.xlu0 %1280
    %1283 = vrot.lane.b32.xlu0 %v1268, 48
    %v1284 = vpop.permute.xlu0 %1283
    %1286 = vrot.lane.b32.xlu0 %v1268, 32
    %v1287 = vpop.permute.xlu0 %1286
    %1289 = vrot.lane.b32.xlu0 %v1268, 16
    %v1290 = vpop.permute.xlu0 %1289
    %v1292 = vrot.slane %v1275, 4
    %v1293 = vsel %vm413, %v1292, %v1268
    %v1295 = vunpack.c.l.s4 1983009808
    %v1296 = vunpack.c.0.s8 %v1295
    %v1297 = vperm.slane %v1293, %v1296
    %v1298 = vrot.slane %v1278, 4
    %v1299 = vsel %vm413, %v1298, %v1272
    %v1301 = vunpack.c.l.s4 1983009808
    %v1302 = vunpack.c.0.s8 %v1301
    %v1303 = vperm.slane %v1299, %v1302
    %v1304 = vrot.slane %v1287, 4
    %v1305 = vsel %vm413, %v1304, %v1281
    %v1307 = vunpack.c.l.s4 1983009808
    %v1308 = vunpack.c.0.s8 %v1307
    %v1309 = vperm.slane %v1305, %v1308
    %v1310 = vrot.slane %v1290, 4
    %v1311 = vsel %vm413, %v1310, %v1284
    %v1313 = vunpack.c.l.s4 1983009808
    %v1314 = vunpack.c.0.s8 %v1313
    %v1315 = vperm.slane %v1311, %v1314
    %v1316 = vrot.slane %v1303, 4
    %v1317 = vsel %vm413, %v1316, %v1297
    %v1319 = vunpack.c.l.s4 1934713408
    %v1320 = vunpack.c.0.s8 %v1319
    %v1321 = vperm.slane %v1317, %v1320
    %v1322 = vrot.slane %v1315, 4
    %v1323 = vsel %vm413, %v1322, %v1309
    %v1325 = vunpack.c.l.s4 1934713408
    %v1326 = vunpack.c.0.s8 %v1325
    %v1327 = vperm.slane %v1323, %v1326
    %v1328 = vrot.slane %v1327, 4
    %v1329 = vsel %vm413, %v1328, %v1321
    %v1330 = vrot.slane %v1321, 4
    %v1331 = vsel %vm413, %v1327, %v1330
    %v1333 = vrot.slane %v1240, 1
    %v1334 = vperm.slane %v1240, 0
    %v1335 = vperm.slane %v1333, 0
    %v1338 = vadd.f32 %v1334, %v1329
    %v1339 = vadd.f32 %v1335, %v1331
    %v1340 = vadd.f32 %v1338, %v142
    %v1341 = vadd.f32 %v1339, %v145
    %v1342 = vtanh.pop %v1340
    %v1343 = vtanh.pop %v1341
    %v1344 = vmul.f32 %v1342, %v466
    %v1345 = vmul.f32 %v1343, %v466
    %v1346 = vsel %vm148, %v1344, 0.0
    %1347 = vadd.xlane.f32.xlu0 %v1346
    %v1348 = vpop.xlane.xlu0 %1347
    %v1349 = vsel %vm148, %v1345, 0.0
    %1350 = vadd.xlane.f32.xlu0 %v1349
    %v1351 = vpop.xlane.xlu0 %1350
    %v1354 = vperm.slane %v1348, %v479
    %v1355 = vperm.slane %v1351, %v479
    %v1356 = vsel %vm482, %v1355, %v1354
    %v1358 = vsel %vm57, %v1356, -1e+30
    %v1359 = vsel %vm486, %v1358, -inf
    %1360 = vmax.xlane.f32.xlu0 %v1359
    %v1361 = vpop.xlane.xlu0 %1360
    %v1362 = vsub.f32 %v1358, %v1361
    %v1363 = vmul.f32 %v1362, 1.442695
    %v1364 = vpow.pop %v1363
    %v1365 = vsel %vm486, %v1364, 0.0
    %1366 = vadd.xlane.f32.xlu0 %v1365
    %v1367 = vpop.xlane.xlu0 %1366
    %v1368 = vrcp.pop %v1367
    %v1369 = vmul.f32 %v1364, %v1368
    %v1370 = vperm.slane %v1369, 0
    %v1371 = vlaneseq
    %v1372 = vshrl.u32 %v1371, 7
    %1374 = vset.pattern.permute.xlu0 %v1372
    %1375 = vperm.xlu0 %1374, %v1370
    %v1376 = vpop.permute.xlu0 %1375
    %v1377 = vperm.slane %v1369, 1
    %v1378 = vlaneseq
    %v1379 = vshrl.u32 %v1378, 7
    %1381 = vset.pattern.permute.xlu0 %v1379
    %1382 = vperm.xlu0 %1381, %v1377
    %v1383 = vpop.permute.xlu0 %1382
    %v1384 = vmul.f32 %v1376, %v54
    %v1385 = vmul.f32 %v1383, %v55
    %v1386 = vsel %vm111, %v1384, 0.0
    %v1387 = vrot.slane %v1386, 4
    %v1388 = vadd.f32 %v1386, %v1387
    %v1389 = vrot.slane %v1388, 2
    %v1390 = vadd.f32 %v1388, %v1389
    %v1391 = vrot.slane %v1390, 1
    %v1392 = vadd.f32 %v1390, %v1391
    %v1393 = vsel %vm111, %v1385, 0.0
    %v1394 = vrot.slane %v1393, 4
    %v1395 = vadd.f32 %v1393, %v1394
    %v1396 = vrot.slane %v1395, 2
    %v1397 = vadd.f32 %v1395, %v1396
    %v1398 = vrot.slane %v1397, 1
    %v1399 = vadd.f32 %v1397, %v1398
    %v1400 = vadd.f32 %v994, %v1369
    %v1404 = vsel %vm482, %v1399, %v1392
    %1405 = vrot.lane.b32.xlu0 %v1404, 32
    %v1406 = vpop.permute.xlu0 %1405
    %1408 = vrot.lane.b32.xlu0 %v1066, 96
    %v1409 = vpop.permute.xlu0 %1408
    %v1411 = vsel %vm111, %v1219, %v1406
    %v1412 = vsel %vm222, %v1411, %v1409
    %v1414 = vsel %vm227, %v1412, 0
    %1416 = vmatpush.xpose.msra.mxu0 %v590
    %1417 = vmatpush.xpose.msra.mxu0 %v587
    %1418 = vmatpush.xpose.msra.mxu0 %v584
    %1419 = vmatpush.xpose.msra.mxu0 %v581
    %1420 = vmatpush.xpose.msra.mxu0 %v578
    %1421 = vmatpush.xpose.msra.mxu0 %v575
    %1422 = vmatpush.xpose.msra.mxu0 %v572
    %1423 = vmatpush.xpose.msra.mxu0 %v569
    %1424 = vmatpush.xpose.msra.mxu0 %v566
    %1425 = vmatpush.xpose.msra.mxu0 %v563
    %1426 = vmatpush.xpose.msra.mxu0 %v560
    %1427 = vmatpush.xpose.msra.mxu0 %v557
    %1428 = vmatpush.xpose.msra.mxu0 %v554
    %1429 = vmatpush.xpose.msra.mxu0 %v551
    %1430 = vmatpush.xpose.msra.mxu0 %v548
    %1431 = vmatpush.xpose.msra.mxu0 %v545
    %1432 = vmatmul.f32.gmra.mxu0 %v1414
    %v1433 = vpop.f32.mrf.mxu0
    %v1434 = vadd.f32 %v539, %v1433
    %1435 = vdwg.mxu0
    %v1436 = vxor.u32 %v1434, 2147483648
    %v1437 = vmul.f32 %v1436, 1.442695
    %v1438 = vpow.pop %v1437
    %v1439 = vadd.f32 %v1438, 1.0
    %v1440 = vrcp.pop %v1439
    %v1441 = vmul.f32 %v1439, %v1440
    %v1442 = vsub.f32 1.0, %v1441
    %v1443 = vmul.f32 %v1440, %v1442
    %v1444 = vadd.f32 %v1440, %v1443
    %vm1445 = vweird.f32 %v1439
    %vm1446 = vweird.f32 %v1440
    %vm1447 = vmor %vm1445, %vm1446
    %v1448 = vsel %vm1447, %v1440, %v1444
    %v1449 = vand.u32 2147483647, %v1439
    %vm1450 = vcmp.eq.f32.partialorder %v1449, 8.507059e+37
    %v1451 = vand.u32 %v1439, 2147483648
    %v1452 = vor.u32 1.1754944e-38, %v1451
    %v1453 = vsel %vm1450, %v1452, %v1448
    %v1454 = vmul.f32 1.0, %v1453
    %v1455 = vtanh.pop %v1434
    %v1456 = vmul.f32 %v1454, %v1060
    %1458 = vrot.lane.b32.xlu0 %v1455, 64
    %v1459 = vpop.permute.xlu0 %1458
    %v1461 = vmul.f32 %v1454, %v1459
    %1463 = vrot.lane.b32.xlu0 %v1461, 32
    %v1464 = vpop.permute.xlu0 %1463
    %v1466 = vadd.f32 %v1456, %v1464
    %v1467 = vtanh.pop %v1466
    %1469 = vrot.lane.b32.xlu0 %v1467, 64
    %v1470 = vpop.permute.xlu0 %1469
    %v1472 = vmul.f32 %v1454, %v1470
    %1474 = vrot.lane.b32.xlu0 %v1472, 32
    %v1475 = vpop.permute.xlu0 %1474
    %v1477 = vsel %vm111, %v1475, %v1406
    %v1479 = vsel %vm222, %v1477, 0
    %1481 = vmatpush.xpose.msra.mxu0 0.0
    %1482 = vmatpush.xpose.msra.mxu0 0.0
    %1483 = vmatpush.xpose.msra.mxu0 0.0
    %1484 = vmatpush.xpose.msra.mxu0 0.0
    %1485 = vmatpush.xpose.msra.mxu0 0.0
    %1486 = vmatpush.xpose.msra.mxu0 0.0
    %1487 = vmatpush.xpose.msra.mxu0 0.0
    %1488 = vmatpush.xpose.msra.mxu0 0.0
    %1489 = vmatpush.xpose.msra.mxu0 0.0
    %1490 = vmatpush.xpose.msra.mxu0 0.0
    %1491 = vmatpush.xpose.msra.mxu0 0.0
    %1492 = vmatpush.xpose.msra.mxu0 0.0
    %1493 = vmatpush.xpose.msra.mxu0 0.0
    %1494 = vmatpush.xpose.msra.mxu0 %v667
    %1495 = vmatpush.xpose.msra.mxu0 %v664
    %1496 = vmatpush.xpose.msra.mxu0 %v661
    %1497 = vmatmul.f32.gmra.mxu0 %v1479
    %v1498 = vpop.f32.mrf.mxu0
    %v1499 = vadd.f32 %v655, %v1498
    %1500 = vdwg.mxu0
    %s1501 = scalar_lea.vmem %s15, 4
    %1502 = vst.msk [vmem:[%s1501] sm:$0x3] %vm689, %v1499
    %s1503 = scalar_lea.vmem %s16, 4
    %1504 = vst.msk [vmem:[%s1503] sm:$0x3] %vm486, %v1369
    %s1506 = scalar_lea.vmem [#allocation2], 4
    %1507 = vst.msk [vmem:[%s1506] sm:$0x3] %vm693, %v1404
    %s1508 = scalar_lea.vmem %s2, 6
    %v1509 = vld [vmem:[%s1508] sm:$0x3]
    %v1511 = vsel %vm148, %v1509, 0
    %1513 = vmatpush.xpose.msra.mxu0 0.0
    %1514 = vmatpush.xpose.msra.mxu0 0.0
    %1515 = vmatpush.xpose.msra.mxu0 0.0
    %1516 = vmatpush.xpose.msra.mxu0 0.0
    %1517 = vmatpush.xpose.msra.mxu0 0.0
    %1518 = vmatpush.xpose.msra.mxu0 0.0
    %1519 = vmatpush.xpose.msra.mxu0 0.0
    %1520 = vmatpush.xpose.msra.mxu0 0.0
    %1521 = vmatpush.xpose.msra.mxu0 0.0
    %1522 = vmatpush.xpose.msra.mxu0 0.0
    %1523 = vmatpush.xpose.msra.mxu0 0.0
    %1524 = vmatpush.xpose.msra.mxu0 0.0
    %1525 = vmatpush.xpose.msra.mxu0 %v162
    %1526 = vmatpush.xpose.msra.mxu0 %v159
    %1527 = vmatpush.xpose.msra.mxu0 %v156
    %1528 = vmatpush.xpose.msra.mxu0 %v153
    %1529 = vmatmul.f32.gmra.mxu0 %v1511
    %v1530 = vpop.f32.mrf.mxu0
    %v1531 = vadd.f32 0.0, %v1530
    %1532 = vdwg.mxu0
    %v1533 = vmax.f32 %v1531, 0.0
    %v1535 = vsel %vm111, %v1533, 0
    %1537 = vmatpush.xpose.msra.mxu0 0.0
    %1538 = vmatpush.xpose.msra.mxu0 0.0
    %1539 = vmatpush.xpose.msra.mxu0 0.0
    %1540 = vmatpush.xpose.msra.mxu0 0.0
    %1541 = vmatpush.xpose.msra.mxu0 0.0
    %1542 = vmatpush.xpose.msra.mxu0 0.0
    %1543 = vmatpush.xpose.msra.mxu0 0.0
    %1544 = vmatpush.xpose.msra.mxu0 0.0
    %1545 = vmatpush.xpose.msra.mxu0 0.0
    %1546 = vmatpush.xpose.msra.mxu0 0.0
    %1547 = vmatpush.xpose.msra.mxu0 0.0
    %1548 = vmatpush.xpose.msra.mxu0 0.0
    %1549 = vmatpush.xpose.msra.mxu0 %v198
    %1550 = vmatpush.xpose.msra.mxu0 %v195
    %1551 = vmatpush.xpose.msra.mxu0 %v192
    %1552 = vmatpush.xpose.msra.mxu0 %v189
    %1553 = vmatmul.f32.gmra.mxu0 %v1535
    %v1554 = vpop.f32.mrf.mxu0
    %v1555 = vadd.f32 0.0, %v1554
    %1556 = vdwg.mxu0
    %v1557 = vmax.f32 %v1555, 0.0
    %1558 = vrot.lane.b32.xlu0 %v1216, 96
    %v1559 = vpop.permute.xlu0 %1558
    %v1561 = vsel %vm111, %v1557, %v1406
    %v1562 = vsel %vm222, %v1561, %v1559
    %v1564 = vsel %vm227, %v1562, 0
    %1566 = vmatpush.xpose.msra.mxu0 %v277
    %1567 = vmatpush.xpose.msra.mxu0 %v274
    %1568 = vmatpush.xpose.msra.mxu0 %v271
    %1569 = vmatpush.xpose.msra.mxu0 %v268
    %1570 = vmatpush.xpose.msra.mxu0 %v265
    %1571 = vmatpush.xpose.msra.mxu0 %v262
    %1572 = vmatpush.xpose.msra.mxu0 %v259
    %1573 = vmatpush.xpose.msra.mxu0 %v256
    %1574 = vmatpush.xpose.msra.mxu0 %v253
    %1575 = vmatpush.xpose.msra.mxu0 %v250
    %1576 = vmatpush.xpose.msra.mxu0 %v247
    %1577 = vmatpush.xpose.msra.mxu0 %v244
    %1578 = vmatpush.xpose.msra.mxu0 %v241
    %1579 = vmatpush.xpose.msra.mxu0 %v238
    %1580 = vmatpush.xpose.msra.mxu0 %v235
    %1581 = vmatpush.xpose.msra.mxu0 %v232
    %1582 = vmatmul.f32.gmra.mxu0 %v1564
    %v1583 = vpop.f32.mrf.mxu0
    %v1584 = vadd.f32 %v225, %v1583
    %1585 = vdwg.mxu0
    %v1586 = vxor.u32 %v1584, 2147483648
    %v1587 = vmul.f32 %v1586, 1.442695
    %v1588 = vpow.pop %v1587
    %v1589 = vadd.f32 %v1588, 1.0
    %v1590 = vrcp.pop %v1589
    %v1591 = vmul.f32 %v1589, %v1590
    %v1592 = vsub.f32 1.0, %v1591
    %v1593 = vmul.f32 %v1590, %v1592
    %v1594 = vadd.f32 %v1590, %v1593
    %vm1595 = vweird.f32 %v1589
    %vm1596 = vweird.f32 %v1590
    %vm1597 = vmor %vm1595, %vm1596
    %v1598 = vsel %vm1597, %v1590, %v1594
    %v1599 = vand.u32 2147483647, %v1589
    %vm1600 = vcmp.eq.f32.partialorder %v1599, 8.507059e+37
    %v1601 = vand.u32 %v1589, 2147483648
    %v1602 = vor.u32 1.1754944e-38, %v1601
    %v1603 = vsel %vm1600, %v1602, %v1598
    %v1604 = vmul.f32 1.0, %v1603
    %v1605 = vtanh.pop %v1584
    %v1606 = vmul.f32 %v1604, %v1210
    %1608 = vrot.lane.b32.xlu0 %v1605, 64
    %v1609 = vpop.permute.xlu0 %1608
    %v1611 = vmul.f32 %v1604, %v1609
    %1613 = vrot.lane.b32.xlu0 %v1611, 32
    %v1614 = vpop.permute.xlu0 %1613
    %v1616 = vadd.f32 %v1606, %v1614
    %v1617 = vtanh.pop %v1616
    %1619 = vrot.lane.b32.xlu0 %v1617, 64
    %v1620 = vpop.permute.xlu0 %1619
    %v1622 = vmul.f32 %v1604, %v1620
    %1624 = vrot.lane.b32.xlu0 %v1622, 32
    %v1625 = vpop.permute.xlu0 %1624
    %v1626 = vsel %vm111, %v1625, 0
    %1628 = vmatpush.xpose.msra.mxu0 0.0
    %1629 = vmatpush.xpose.msra.mxu0 0.0
    %1630 = vmatpush.xpose.msra.mxu0 0.0
    %1631 = vmatpush.xpose.msra.mxu0 0.0
    %1632 = vmatpush.xpose.msra.mxu0 0.0
    %1633 = vmatpush.xpose.msra.mxu0 0.0
    %1634 = vmatpush.xpose.msra.mxu0 0.0
    %1635 = vmatpush.xpose.msra.mxu0 0.0
    %1636 = vmatpush.xpose.msra.mxu0 0.0
    %1637 = vmatpush.xpose.msra.mxu0 0.0
    %1638 = vmatpush.xpose.msra.mxu0 0.0
    %1639 = vmatpush.xpose.msra.mxu0 0.0
    %1640 = vmatpush.xpose.msra.mxu0 0.0
    %1641 = vmatpush.xpose.msra.mxu0 0.0
    %1642 = vmatpush.xpose.msra.mxu0 %v345
    %1643 = vmatpush.xpose.msra.mxu0 %v342
    %1644 = vmatmul.f32.gmra.mxu0 %v1626
    %v1645 = vpop.f32.mrf.mxu0
    %v1646 = vadd.f32 0.0, %v1645
    %1647 = vdwg.mxu0
    %1649 = vrot.lane.b32.xlu0 %v1400, 8
    %v1650 = vpop.permute.xlu0 %1649
    %v1652 = vsel %vm839, %v1369, %v1650
    %v1654 = vsel %vm148, %v1652, 0
    %1656 = vmatpush.msra.mxu0 0.0
    %1657 = vmatpush.msra.mxu0 0.0
    %1658 = vmatpush.msra.mxu0 0.0
    %1659 = vmatpush.msra.mxu0 0.0
    %1660 = vmatpush.msra.mxu0 0.0
    %1661 = vmatpush.msra.mxu0 0.0
    %1662 = vmatpush.msra.mxu0 0.0
    %1663 = vmatpush.msra.mxu0 0.0
    %1664 = vmatpush.msra.mxu0 0.0
    %1665 = vmatpush.msra.mxu0 0.0
    %1666 = vmatpush.msra.mxu0 0.0
    %1667 = vmatpush.msra.mxu0 0.0
    %1668 = vmatpush.msra.mxu0 0.0
    %1669 = vmatpush.msra.mxu0 0.0
    %1670 = vmatpush.msra.mxu0 %v86
    %1671 = vmatpush.msra.mxu0 %v85
    %1672 = vmatmul.f32.gmra.mxu0 %v1654
    %v1673 = vpop.f32.mrf.mxu0
    %v1674 = vadd.f32 0.0, %v1673
    %1675 = vdwg.mxu0
    %1677 = vrot.lane.b32.xlu0 %v1674, 112
    %v1678 = vpop.permute.xlu0 %1677
    %1680 = vrot.lane.b32.xlu0 %v1674, 96
    %v1681 = vpop.permute.xlu0 %1680
    %1683 = vrot.lane.b32.xlu0 %v1674, 80
    %v1684 = vpop.permute.xlu0 %1683
    %1686 = vrot.lane.b32.xlu0 %v1674, 64
    %v1687 = vpop.permute.xlu0 %1686
    %1689 = vrot.lane.b32.xlu0 %v1674, 48
    %v1690 = vpop.permute.xlu0 %1689
    %1692 = vrot.lane.b32.xlu0 %v1674, 32
    %v1693 = vpop.permute.xlu0 %1692
    %1695 = vrot.lane.b32.xlu0 %v1674, 16
    %v1696 = vpop.permute.xlu0 %1695
    %v1698 = vrot.slane %v1681, 4
    %v1699 = vsel %vm413, %v1698, %v1674
    %v1701 = vunpack.c.l.s4 1983009808
    %v1702 = vunpack.c.0.s8 %v1701
    %v1703 = vperm.slane %v1699, %v1702
    %v1704 = vrot.slane %v1684, 4
    %v1705 = vsel %vm413, %v1704, %v1678
    %v1707 = vunpack.c.l.s4 1983009808
    %v1708 = vunpack.c.0.s8 %v1707
    %v1709 = vperm.slane %v1705, %v1708
    %v1710 = vrot.slane %v1693, 4
    %v1711 = vsel %vm413, %v1710, %v1687
    %v1713 = vunpack.c.l.s4 1983009808
    %v1714 = vunpack.c.0.s8 %v1713
    %v1715 = vperm.slane %v1711, %v1714
    %v1716 = vrot.slane %v1696, 4
    %v1717 = vsel %vm413, %v1716, %v1690
    %v1719 = vunpack.c.l.s4 1983009808
    %v1720 = vunpack.c.0.s8 %v1719
    %v1721 = vperm.slane %v1717, %v1720
    %v1722 = vrot.slane %v1709, 4
    %v1723 = vsel %vm413, %v1722, %v1703
    %v1725 = vunpack.c.l.s4 1934713408
    %v1726 = vunpack.c.0.s8 %v1725
    %v1727 = vperm.slane %v1723, %v1726
    %v1728 = vrot.slane %v1721, 4
    %v1729 = vsel %vm413, %v1728, %v1715
    %v1731 = vunpack.c.l.s4 1934713408
    %v1732 = vunpack.c.0.s8 %v1731
    %v1733 = vperm.slane %v1729, %v1732
    %v1734 = vrot.slane %v1733, 4
    %v1735 = vsel %vm413, %v1734, %v1727
    %v1736 = vrot.slane %v1727, 4
    %v1737 = vsel %vm413, %v1733, %v1736
    %v1739 = vrot.slane %v1646, 1
    %v1740 = vperm.slane %v1646, 0
    %v1741 = vperm.slane %v1739, 0
    %v1744 = vadd.f32 %v1740, %v1735
    %v1745 = vadd.f32 %v1741, %v1737
    %v1746 = vadd.f32 %v1744, %v142
    %v1747 = vadd.f32 %v1745, %v145
    %v1748 = vtanh.pop %v1746
    %v1749 = vtanh.pop %v1747
    %v1750 = vmul.f32 %v1748, %v466
    %v1751 = vmul.f32 %v1749, %v466
    %v1752 = vsel %vm148, %v1750, 0.0
    %1753 = vadd.xlane.f32.xlu0 %v1752
    %v1754 = vpop.xlane.xlu0 %1753
    %v1755 = vsel %vm148, %v1751, 0.0
    %1756 = vadd.xlane.f32.xlu0 %v1755
    %v1757 = vpop.xlane.xlu0 %1756
    %v1760 = vperm.slane %v1754, %v479
    %v1761 = vperm.slane %v1757, %v479
    %v1762 = vsel %vm482, %v1761, %v1760
    %v1764 = vsel %vm57, %v1762, -1e+30
    %v1765 = vsel %vm486, %v1764, -inf
    %1766 = vmax.xlane.f32.xlu0 %v1765
    %v1767 = vpop.xlane.xlu0 %1766
    %v1768 = vsub.f32 %v1764, %v1767
    %v1769 = vmul.f32 %v1768, 1.442695
    %v1770 = vpow.pop %v1769
    %v1771 = vsel %vm486, %v1770, 0.0
    %1772 = vadd.xlane.f32.xlu0 %v1771
    %v1773 = vpop.xlane.xlu0 %1772
    %v1774 = vrcp.pop %v1773
    %v1775 = vmul.f32 %v1770, %v1774
    %v1776 = vperm.slane %v1775, 0
    %v1777 = vlaneseq
    %v1778 = vshrl.u32 %v1777, 7
    %1780 = vset.pattern.permute.xlu0 %v1778
    %1781 = vperm.xlu0 %1780, %v1776
    %v1782 = vpop.permute.xlu0 %1781
    %v1783 = vperm.slane %v1775, 1
    %v1784 = vlaneseq
    %v1785 = vshrl.u32 %v1784, 7
    %1787 = vset.pattern.permute.xlu0 %v1785
    %1788 = vperm.xlu0 %1787, %v1783
    %v1789 = vpop.permute.xlu0 %1788
    %v1790 = vmul.f32 %v1782, %v54
    %v1791 = vmul.f32 %v1789, %v55
    %v1792 = vsel %vm111, %v1790, 0.0
    %v1793 = vrot.slane %v1792, 4
    %v1794 = vadd.f32 %v1792, %v1793
    %v1795 = vrot.slane %v1794, 2
    %v1796 = vadd.f32 %v1794, %v1795
    %v1797 = vrot.slane %v1796, 1
    %v1798 = vadd.f32 %v1796, %v1797
    %v1799 = vsel %vm111, %v1791, 0.0
    %v1800 = vrot.slane %v1799, 4
    %v1801 = vadd.f32 %v1799, %v1800
    %v1802 = vrot.slane %v1801, 2
    %v1803 = vadd.f32 %v1801, %v1802
    %v1804 = vrot.slane %v1803, 1
    %v1805 = vadd.f32 %v1803, %v1804
    %v1809 = vsel %vm482, %v1805, %v1798
    %1810 = vrot.lane.b32.xlu0 %v1809, 32
    %v1811 = vpop.permute.xlu0 %1810
    %1813 = vrot.lane.b32.xlu0 %v1472, 96
    %v1814 = vpop.permute.xlu0 %1813
    %v1816 = vsel %vm111, %v1625, %v1811
    %v1817 = vsel %vm222, %v1816, %v1814
    %v1819 = vsel %vm227, %v1817, 0
    %1821 = vmatpush.xpose.msra.mxu0 %v590
    %1822 = vmatpush.xpose.msra.mxu0 %v587
    %1823 = vmatpush.xpose.msra.mxu0 %v584
    %1824 = vmatpush.xpose.msra.mxu0 %v581
    %1825 = vmatpush.xpose.msra.mxu0 %v578
    %1826 = vmatpush.xpose.msra.mxu0 %v575
    %1827 = vmatpush.xpose.msra.mxu0 %v572
    %1828 = vmatpush.xpose.msra.mxu0 %v569
    %1829 = vmatpush.xpose.msra.mxu0 %v566
    %1830 = vmatpush.xpose.msra.mxu0 %v563
    %1831 = vmatpush.xpose.msra.mxu0 %v560
    %1832 = vmatpush.xpose.msra.mxu0 %v557
    %1833 = vmatpush.xpose.msra.mxu0 %v554
    %1834 = vmatpush.xpose.msra.mxu0 %v551
    %1835 = vmatpush.xpose.msra.mxu0 %v548
    %1836 = vmatpush.xpose.msra.mxu0 %v545
    %1837 = vmatmul.f32.gmra.mxu0 %v1819
    %v1838 = vpop.f32.mrf.mxu0
    %v1839 = vadd.f32 %v539, %v1838
    %1840 = vdwg.mxu0
    %v1841 = vxor.u32 %v1839, 2147483648
    %v1842 = vmul.f32 %v1841, 1.442695
    %v1843 = vpow.pop %v1842
    %v1844 = vadd.f32 %v1843, 1.0
    %v1845 = vrcp.pop %v1844
    %v1846 = vmul.f32 %v1844, %v1845
    %v1847 = vsub.f32 1.0, %v1846
    %v1848 = vmul.f32 %v1845, %v1847
    %v1849 = vadd.f32 %v1845, %v1848
    %vm1850 = vweird.f32 %v1844
    %vm1851 = vweird.f32 %v1845
    %vm1852 = vmor %vm1850, %vm1851
    %v1853 = vsel %vm1852, %v1845, %v1849
    %v1854 = vand.u32 2147483647, %v1844
    %vm1855 = vcmp.eq.f32.partialorder %v1854, 8.507059e+37
    %v1856 = vand.u32 %v1844, 2147483648
    %v1857 = vor.u32 1.1754944e-38, %v1856
    %v1858 = vsel %vm1855, %v1857, %v1853
    %v1859 = vmul.f32 1.0, %v1858
    %v1860 = vtanh.pop %v1839
    %v1861 = vmul.f32 %v1859, %v1466
    %1863 = vrot.lane.b32.xlu0 %v1860, 64
    %v1864 = vpop.permute.xlu0 %1863
    %v1866 = vmul.f32 %v1859, %v1864
    %1868 = vrot.lane.b32.xlu0 %v1866, 32
    %v1869 = vpop.permute.xlu0 %1868
    %v1871 = vadd.f32 %v1861, %v1869
    %v1872 = vtanh.pop %v1871
    %1874 = vrot.lane.b32.xlu0 %v1872, 64
    %v1875 = vpop.permute.xlu0 %1874
    %v1877 = vmul.f32 %v1859, %v1875
    %1879 = vrot.lane.b32.xlu0 %v1877, 32
    %v1880 = vpop.permute.xlu0 %1879
    %v1882 = vsel %vm111, %v1880, %v1811
    %v1884 = vsel %vm222, %v1882, 0
    %1886 = vmatpush.xpose.msra.mxu0 0.0
    %1887 = vmatpush.xpose.msra.mxu0 0.0
    %1888 = vmatpush.xpose.msra.mxu0 0.0
    %1889 = vmatpush.xpose.msra.mxu0 0.0
    %1890 = vmatpush.xpose.msra.mxu0 0.0
    %1891 = vmatpush.xpose.msra.mxu0 0.0
    %1892 = vmatpush.xpose.msra.mxu0 0.0
    %1893 = vmatpush.xpose.msra.mxu0 0.0
    %1894 = vmatpush.xpose.msra.mxu0 0.0
    %1895 = vmatpush.xpose.msra.mxu0 0.0
    %1896 = vmatpush.xpose.msra.mxu0 0.0
    %1897 = vmatpush.xpose.msra.mxu0 0.0
    %1898 = vmatpush.xpose.msra.mxu0 0.0
    %1899 = vmatpush.xpose.msra.mxu0 %v667
    %1900 = vmatpush.xpose.msra.mxu0 %v664
    %1901 = vmatpush.xpose.msra.mxu0 %v661
    %1902 = vmatmul.f32.gmra.mxu0 %v1884
    %v1903 = vpop.f32.mrf.mxu0
    %v1904 = vadd.f32 %v655, %v1903
    %1905 = vdwg.mxu0
    %s1906 = scalar_lea.vmem %s15, 6
    %1907 = vst.msk [vmem:[%s1906] sm:$0x3] %vm689, %v1904
    %s1908 = scalar_lea.vmem %s16, 6
    %1909 = vst.msk [vmem:[%s1908] sm:$0x3] %vm486, %v1775
    %s1911 = scalar_lea.vmem [#allocation2], 6
    %1912 = vst.msk [vmem:[%s1911] sm:$0x3] %vm693, %v1809
    // Predicated region
    $region62: #{tacotron_decoder_forward.1} parent=1 // pred_check
      _
    $region63: #{tacotron_decoder_forward.1} parent=1 // pred_check_branch
      %1914 = sbr.rel (0) target = $region65
    $region64: #{tacotron_decoder_forward.1} parent=1 // pred_region
      _
    $region65: #{tacotron_decoder_forward.1} parent=1 // pred_fallthru
      _
    // Predicated region
    $region66: #{tacotron_decoder_forward.1} parent=1 // pred_check
      _
    $region67: #{tacotron_decoder_forward.1} parent=1 // pred_check_branch
      %1916 = sbr.rel (0) target = $region69
    $region68: #{tacotron_decoder_forward.1} parent=1 // pred_region
      _
    $region69: #{tacotron_decoder_forward.1} parent=1 // pred_fallthru
      _
    // Predicated region
    $region70: #{tacotron_decoder_forward.1} parent=1 // pred_check
      _
    $region71: #{tacotron_decoder_forward.1} parent=1 // pred_check_branch
      %1918 = sbr.rel (0) target = $region73
    $region72: #{tacotron_decoder_forward.1} parent=1 // pred_region
      %1920 = vsyncadd [#allocation3], 0
      %s1921 = sshll.u32 [#allocation2], 4
      %s1922 = int_to_ptr.vmem [resolvable:$true] %s1921
      %s1923 = sshll.u32 %s17, 4
      %s1924 = int_to_ptr.hbm [resolvable:$true] %s1923
      %1929 = dma.vmem_to_hbm [thread:$0]  %s1922, 128, %s1924, [#allocation3], 32, 32, 2
    $region73: #{tacotron_decoder_forward.1} parent=1 // pred_fallthru
      _
    // Predicated region
    $region74: #{tacotron_decoder_forward.1} parent=1 // pred_check
      _
    $region75: #{tacotron_decoder_forward.1} parent=1 // pred_check_branch
      %1931 = sbr.rel (0) target = $region77
    $region76: #{tacotron_decoder_forward.1} parent=1 // pred_region
      _
    $region77: #{tacotron_decoder_forward.1} parent=1 // pred_fallthru
      _
    // Predicated region
    $region78: #{tacotron_decoder_forward.1} parent=1 // pred_check
      _
    $region79: #{tacotron_decoder_forward.1} parent=1 // pred_check_branch
      %1933 = sbr.rel (0) target = $region81
    $region80: #{tacotron_decoder_forward.1} parent=1 // pred_region
      _
    $region81: #{tacotron_decoder_forward.1} parent=1 // pred_fallthru
      _
    // Predicated region
    $region82: #{tacotron_decoder_forward.1} parent=1 // pred_check
      _
    $region83: #{tacotron_decoder_forward.1} parent=1 // pred_check_branch
      %1935 = sbr.rel (0) target = $region85
    $region84: #{tacotron_decoder_forward.1} parent=1 // pred_region
      %1937 = dma.done [#allocation3], 128
    $region85: #{tacotron_decoder_forward.1} parent=1 // pred_fallthru
      _
    %1938 = vsyncpa [#allocation3], 1

</llo_original>
